<compile_context>
chip_gen: v7x
topology: tpu7x:2x2x1
jax: 0.10.0
libtpu: 0.0.40
codegen_flags: <defaults>
</compile_context>

<pallas_src>
import functools

import jax
import jax.numpy as jnp
from jax.experimental import pallas as pl
from jax.experimental.pallas import tpu as pltpu


def _round_up(x: int, m: int) -> int:
    return ((x + m - 1) // m) * m


def _fused_mlp_kernel(*refs, relus, compute_dtype, vpu_dtype):
    """Whole compiled Net in one kernel.

    refs = (x_ref, w1_ref, b1_ref, ..., wL_ref, bL_ref, o_ref).
    Per layer: y = x @ W (bf16 MXU, f32 accumulate), bias add + optional ReLU
    in `vpu_dtype` (bf16 on v6e/v7x, f32 on v5e).  Intermediates stay on-chip;
    nothing bounces through HBM between layers.
    """
    x_ref, o_ref = refs[0], refs[-1]
    wb_refs = refs[1:-1]

    h = x_ref[...]                                          # (tm, K0) bf16
    for li, apply_relu in enumerate(relus):
        w = wb_refs[2 * li][...]                            # (Kp, Np) bf16
        b = wb_refs[2 * li + 1][...]                        # (1,  Np) vpu_dtype
        y = jnp.dot(h.astype(compute_dtype), w,
                    preferred_element_type=jnp.float32)     # MXU, f32 acc
        y = y.astype(vpu_dtype) + b                         # VPU
        if apply_relu:
            y = jnp.maximum(y, 0.0)
        h = y
    o_ref[...] = h.astype(o_ref.dtype)


class PallasNet:
    """JAX mirror of Net: add_block -> compile -> forward (nn.Sequential),
    with the whole sequential forward fused into a single Pallas kernel."""

    def __init__(self, name="basic_net", compute_dtype=jnp.bfloat16,
                 out_dtype=jnp.bfloat16):
        self.name = name
        self.compute_dtype = compute_dtype
        self.out_dtype = out_dtype
        self.blocks = []              # list of (W, b(1,N), apply_relu)
        self._compiled = False
        self._calls = {}
        self._fwd_cache = {}
        self._use_buffered = True     # single-buffer resident weight blocks

        kind = ""
        try:
            kind = jax.devices()[0].device_kind.lower()
        except Exception:
            pass
        self._is_v7 = "7" in kind                     # 2 TensorCores, 64 MiB VMEM
        old_gen = any(t in kind for t in ("v2", "v3", "v4", "v5"))
        self._has_bf16_vpu = not old_gen              # v6e / v7x VALUs do bf16
        self._vpu_dtype = jnp.bfloat16 if self._has_bf16_vpu else jnp.float32
        # MXU: 2x256x256 on v6e/v7x, 4x128x128 on v5e -> pad feature dims to match.
        self._pad_mult = 256 if self._has_bf16_vpu else 128
        if self._is_v7:
            self._vmem_limit = 56 * 1024 * 1024       # 64 MiB physical
        elif any(t in kind for t in ("v4", "v5", "v6")):
            self._vmem_limit = 100 * 1024 * 1024      # 128 MiB physical
        else:
            self._vmem_limit = None
        self._vmem_budget = int(0.85 * (self._vmem_limit or 16 * 1024 * 1024))

    # --- Net API -----------------------------------------------------------
    def add_block(self, w, b, apply_relu):
        if self._compiled:
            raise Exception("Cannot add a block to a compiled network.")
        self.blocks.append((jnp.asarray(w), jnp.asarray(b).reshape(1, -1),
                            bool(apply_relu)))

    def compile(self):
        if self._compiled:
            raise Exception("Cannot compile twice.")
        assert len(self.blocks) > 0
        self._relus = tuple(r for (_, _, r) in self.blocks)
        # feature dims along the chain and their MXU-aligned padded sizes
        self._dims = [self.blocks[0][0].shape[0]] + \
                     [w.shape[1] for (w, _, _) in self.blocks]
        self._padded_dims = [_round_up(d, self._pad_mult) for d in self._dims]

        ws, bs = [], []
        for li, (w, b, _) in enumerate(self.blocks):
            kp = self._padded_dims[li]
            np_ = self._padded_dims[li + 1]
            wp = jnp.zeros((kp, np_), self.compute_dtype)
            wp = wp.at[: w.shape[0], : w.shape[1]].set(w.astype(self.compute_dtype))
            bp = jnp.zeros((1, np_), self._vpu_dtype)
            bp = bp.at[:, : b.shape[1]].set(b.astype(self._vpu_dtype))
            ws.append(wp)
            bs.append(bp)
        self._ws, self._bs = ws, bs
        self._weight_bytes = sum(int(a.size) * a.dtype.itemsize for a in ws + bs)
        self._compiled = True

    @property
    def output_size(self):
        assert len(self.blocks) > 0
        return self.blocks[-1][0].shape[-1]

    # --- tiling selection ----------------------------------------------------
    def _select_tiling(self, B):
        K0 = self._padded_dims[0]
        Nout = self._padded_dims[-1]
        in_isz = jnp.dtype(self.compute_dtype).itemsize
        out_isz = jnp.dtype(self.out_dtype).itemsize
        max_dim = max(self._padded_dims)

        def grid_fits(tm):
            act = 2 * tm * K0 * in_isz + 2 * tm * Nout * out_isz   # dbl-buffered I/O tiles
            inter = 4 * tm * max_dim                               # f32 intermediate headroom
            resident = self._weight_bytes * (1 if self._use_buffered else 2)
            return resident + act + inter <= self._vmem_budget

        if B <= 128:
            # Small batch: single-shot grid-free call; bf16 -> round rows to 16.
            return "single", _round_up(max(B, 1), 16), 0

        for tm in (512, 256, 128):
            if tm > B:
                continue
            B_pad = _round_up(B, tm)
            num_tiles = B_pad // tm
            if self._is_v7 and num_tiles < 2 and tm > 128:
                continue          # keep >=2 grid steps so both v7x TCs get work
            if not grid_fits(tm):
                continue
            if num_tiles == 1:
                return "single", B_pad, 0
            return "grid", B_pad, tm
        # TODO(synk): add an N/K-tiled fallback (streamed weights, f32 acc
        # scratch + pl.when init/finalize) for Nets whose resident weights
        # exceed the v7x 64 MiB VMEM budget.
        return "grid", _round_up(B, 128), 128

    # --- fused pallas_call builder ------------------------------------------
    def _build_call(self, mode, B_pad, tm):
        key = (mode, B_pad, tm, self._use_buffered)
        if key in self._calls:
            return self._calls[key]

        L = len(self.blocks)
        K0 = self._padded_dims[0]
        Nout = self._padded_dims[-1]
        in_isz = jnp.dtype(self.compute_dtype).itemsize
        out_isz = jnp.dtype(self.out_dtype).itemsize

        kernel = functools.partial(_fused_mlp_kernel,
                                   relus=self._relus,
                                   compute_dtype=self.compute_dtype,
                                   vpu_dtype=self._vpu_dtype)

        flops = 2 * sum(B_pad * self._padded_dims[i] * self._padded_dims[i + 1]
                        for i in range(L))
        # bf16 input stream + bf16 output + weights/biases counted once.
        bytes_accessed = (B_pad * K0 * in_isz + B_pad * Nout * out_isz
                          + self._weight_bytes)
        cost = pl.CostEstimate(flops=int(flops), transcendentals=0,
                               bytes_accessed=int(bytes_accessed))
        out_shape = jax.ShapeDtypeStruct((B_pad, Nout), self.out_dtype)

        cp_kwargs = {}
        if self._vmem_limit is not None:
            cp_kwargs["vmem_limit_bytes"] = self._vmem_limit

        if mode == "single":
            # Small batch: grid-free single shot; everything VMEM-resident.
            vmem = pltpu.MemorySpace.VMEM
            call = pl.pallas_call(
                kernel,
                out_shape=out_shape,
                in_specs=[pl.BlockSpec(memory_space=vmem)
                          for _ in range(1 + 2 * L)],
                out_specs=pl.BlockSpec(memory_space=vmem),
                compiler_params=pltpu.CompilerParams(**cp_kwargs),
                cost_estimate=cost,
            )
        else:
            num_tiles = B_pad // tm

            def resident_spec(shape):
                # Constant index_map -> block is DMA'd once across grid steps;
                # Buffered(1) drops the useless second buffer (halves the
                # resident weight VMEM footprint, matters on v7x's 64 MiB).
                if self._use_buffered:
                    try:
                        return pl.BlockSpec(shape, lambda i: (0, 0),
                                            pipeline_mode=pl.Buffered(1))
                    except Exception:
                        self._use_buffered = False
                return pl.BlockSpec(shape, lambda i: (0, 0))

            in_specs = [pl.BlockSpec((tm, K0), lambda i: (i, 0))]
            for li in range(L):
                kp = self._padded_dims[li]
                np_ = self._padded_dims[li + 1]
                in_specs.append(resident_spec((kp, np_)))
                in_specs.append(resident_spec((1, np_)))
            out_specs = pl.BlockSpec((tm, Nout), lambda i: (i, 0))

            cp_kwargs["dimension_semantics"] = ("parallel",)
            call = pl.pallas_call(
                kernel,
                out_shape=out_shape,
                grid=(num_tiles,),
                in_specs=in_specs,
                out_specs=out_specs,
                compiler_params=pltpu.CompilerParams(**cp_kwargs),
                cost_estimate=cost,
            )

        self._calls[key] = call
        return call

    # --- jitted wrapper: pad/cast + pallas_call + un-pad slice in one jit ----
    def _get_forward_fn(self, B):
        mode, B_pad, tm = self._select_tiling(B)
        key = (B, mode, B_pad, tm, self._use_buffered)
        if key in self._fwd_cache:
            return self._fwd_cache[key]

        call = self._build_call(mode, B_pad, tm)
        K = self._dims[0]
        K0 = self._padded_dims[0]
        Nout_true = self._dims[-1]
        compute_dtype = self.compute_dtype

        def fwd(x, wbs):
            xp = jnp.pad(x.astype(compute_dtype),
                         ((0, B_pad - x.shape[0]), (0, K0 - x.shape[1])))
            out_pad = call(xp, *wbs)
            return out_pad[:x.shape[0], :Nout_true]

        fn = jax.jit(fwd)
        self._fwd_cache[key] = fn
        return fn

    # --- forward -------------------------------------------------------------
    def forward(self, x):
        if not self._compiled:
            raise Exception("Cannot forward a network that has not been compiled.")
        B, K = x.shape
        assert K == self._dims[0]

        wbs = []
        for w, b in zip(self._ws, self._bs):
            wbs.append(w)
            wbs.append(b)
        wbs = tuple(wbs)

        try:
            return self._get_forward_fn(B)(x, wbs)
        except Exception:
            if not self._use_buffered:
                raise
            # Fallback if Buffered(1) single-buffering is rejected by the
            # installed Pallas version: rebuild with default double buffering.
            self._use_buffered = False
            self._calls.clear()
            self._fwd_cache.clear()
            return self._get_forward_fn(B)(x, wbs)

    __call__ = forward


def _init_linear(key, fan_in, fan_out, dtype=jnp.float32):
    """Deterministic Kaiming-uniform-style init (matches torch.nn.Linear bounds)."""
    kw, kb = jax.random.split(key)
    bound = 1.0 / jnp.sqrt(fan_in)
    w = jax.random.uniform(kw, (fan_in, fan_out), dtype, -bound, bound)
    b = jax.random.uniform(kb, (1, fan_out), dtype, -bound, bound)
    return w, b


if __name__ == "__main__":
    key = jax.random.PRNGKey(0)
    k_x, k_x2, k1, k2, k3 = jax.random.split(key, 5)

    batch, d_in, d_hidden, d_out = 8, 32, 64, 16
    x = jax.random.normal(k_x, (batch, d_in), jnp.float32)

    w1, b1 = _init_linear(k1, d_in, d_hidden)
    w2, b2 = _init_linear(k2, d_hidden, d_hidden)
    w3, b3 = _init_linear(k3, d_hidden, d_out)

    net = PallasNet(name="basic_net")
    net.add_block(w1, b1, apply_relu=True)    # Block 1: Linear + ReLU
    net.add_block(w2, b2, apply_relu=True)    # Block 2: Linear + ReLU
    net.add_block(w3, b3, apply_relu=False)   # Block 3: Linear (head)
    net.compile()

    def reference(xs):
        # Pure-JAX reference with the kernel's precision contract:
        # bf16 MXU matmuls with f32 accumulation, bias/ReLU in the VPU dtype
        # (bf16 on v6e/v7x, f32 on v5e), bf16 output.
        h = xs.astype(net.compute_dtype)
        for (w, b, relu) in net.blocks:
            y = jnp.dot(h.astype(net.compute_dtype), w.astype(net.compute_dtype),
                        preferred_element_type=jnp.float32)
            y = y.astype(net._vpu_dtype) + b.astype(net._vpu_dtype)
            if relu:
                y = jnp.maximum(y, 0.0)
            h = y
        return h.astype(net.out_dtype).astype(jnp.float32)

    # Small batch -> grid-free single-shot fused kernel (all VMEM-resident).
    out = jax.block_until_ready(net(x))
    assert out.shape == (batch, d_out)
    assert jnp.allclose(out.astype(jnp.float32), reference(x), rtol=5e-2, atol=2e-2)

    # Larger batch -> batch grid (tm swept under VMEM budget), weights/biases
    # single-buffered and VMEM-resident across grid steps.
    x_big = jax.random.normal(k_x2, (384, d_in), jnp.float32)
    out_big = jax.block_until_ready(net(x_big))
    assert out_big.shape == (384, d_out)
    assert jnp.allclose(out_big.astype(jnp.float32), reference(x_big),
                        rtol=5e-2, atol=2e-2)

    print("KERNEL_OK")
</pallas_src>

<mosaic_0001>
module attributes {stable_mosaic.version = 11 : i64} {
  func.func @_fused_mlp_kernel(%arg0: memref<16x256xbf16, #tpu.memory_space<vmem>>, %arg1: memref<256x256xbf16, #tpu.memory_space<vmem>>, %arg2: memref<1x256xbf16, #tpu.memory_space<vmem>>, %arg3: memref<256x256xbf16, #tpu.memory_space<vmem>>, %arg4: memref<1x256xbf16, #tpu.memory_space<vmem>>, %arg5: memref<256x256xbf16, #tpu.memory_space<vmem>>, %arg6: memref<1x256xbf16, #tpu.memory_space<vmem>>, %arg7: memref<16x256xbf16, #tpu.memory_space<vmem>>) attributes {dimension_semantics = [], scalar_prefetch = 0 : i64, scratch_operands = 0 : i64, tpu.core_type = #tpu.core_type<tc>} {
    %c0 = arith.constant 0 : index
    %c0_0 = arith.constant 0 : index
    %0 = vector.load %arg0[%c0, %c0_0] : memref<16x256xbf16, #tpu.memory_space<vmem>>, vector<16x256xbf16>
    %c0_1 = arith.constant 0 : index
    %c0_2 = arith.constant 0 : index
    %1 = vector.load %arg1[%c0_1, %c0_2] : memref<256x256xbf16, #tpu.memory_space<vmem>>, vector<256x256xbf16>
    %c0_3 = arith.constant 0 : index
    %c0_4 = arith.constant 0 : index
    %2 = vector.load %arg2[%c0_3, %c0_4] : memref<1x256xbf16, #tpu.memory_space<vmem>>, vector<1x256xbf16>
    %cst = arith.constant dense<0.000000e+00> : vector<16x256xf32>
    %3 = tpu.matmul %0, %1, %cst {dimension_numbers = #tpu.dot_dimension_numbers<[1], [0], [0], [1], [0, 0, 1, 1], [], []>} : vector<16x256xbf16>, vector<256x256xbf16>, vector<16x256xf32> -> vector<16x256xf32>
    %4 = arith.truncf %3 : vector<16x256xf32> to vector<16x256xbf16>
    %5 = vector.broadcast %2 : vector<1x256xbf16> to vector<16x256xbf16>
    %6 = arith.addf %4, %5 : vector<16x256xbf16>
    %cst_5 = arith.constant 0.000000e+00 : bf16
    %7 = vector.broadcast %cst_5 : bf16 to vector<16x256xbf16>
    %8 = arith.maximumf %6, %7 : vector<16x256xbf16>
    %c0_6 = arith.constant 0 : index
    %c0_7 = arith.constant 0 : index
    %9 = vector.load %arg3[%c0_6, %c0_7] : memref<256x256xbf16, #tpu.memory_space<vmem>>, vector<256x256xbf16>
    %c0_8 = arith.constant 0 : index
    %c0_9 = arith.constant 0 : index
    %10 = vector.load %arg4[%c0_8, %c0_9] : memref<1x256xbf16, #tpu.memory_space<vmem>>, vector<1x256xbf16>
    %cst_10 = arith.constant dense<0.000000e+00> : vector<16x256xf32>
    %11 = tpu.matmul %8, %9, %cst_10 {dimension_numbers = #tpu.dot_dimension_numbers<[1], [0], [0], [1], [0, 0, 1, 1], [], []>} : vector<16x256xbf16>, vector<256x256xbf16>, vector<16x256xf32> -> vector<16x256xf32>
    %12 = arith.truncf %11 : vector<16x256xf32> to vector<16x256xbf16>
    %13 = vector.broadcast %10 : vector<1x256xbf16> to vector<16x256xbf16>
    %14 = arith.addf %12, %13 : vector<16x256xbf16>
    %cst_11 = arith.constant 0.000000e+00 : bf16
    %15 = vector.broadcast %cst_11 : bf16 to vector<16x256xbf16>
    %16 = arith.maximumf %14, %15 : vector<16x256xbf16>
    %c0_12 = arith.constant 0 : index
    %c0_13 = arith.constant 0 : index
    %17 = vector.load %arg5[%c0_12, %c0_13] : memref<256x256xbf16, #tpu.memory_space<vmem>>, vector<256x256xbf16>
    %c0_14 = arith.constant 0 : index
    %c0_15 = arith.constant 0 : index
    %18 = vector.load %arg6[%c0_14, %c0_15] : memref<1x256xbf16, #tpu.memory_space<vmem>>, vector<1x256xbf16>
    %cst_16 = arith.constant dense<0.000000e+00> : vector<16x256xf32>
    %19 = tpu.matmul %16, %17, %cst_16 {dimension_numbers = #tpu.dot_dimension_numbers<[1], [0], [0], [1], [0, 0, 1, 1], [], []>} : vector<16x256xbf16>, vector<256x256xbf16>, vector<16x256xf32> -> vector<16x256xf32>
    %20 = arith.truncf %19 : vector<16x256xf32> to vector<16x256xbf16>
    %21 = vector.broadcast %18 : vector<1x256xbf16> to vector<16x256xbf16>
    %22 = arith.addf %20, %21 : vector<16x256xbf16>
    %c0_17 = arith.constant 0 : index
    %c0_18 = arith.constant 0 : index
    %23 = vector.load %arg7[%c0_17, %c0_18] : memref<16x256xbf16, #tpu.memory_space<vmem>>, vector<16x256xbf16>
    tpu.vector_store %arg7[%c0_17, %c0_18], %22 {strides = array<i32>} : memref<16x256xbf16, #tpu.memory_space<vmem>>, vector<16x256xbf16>,
    return
  }
}

module attributes {stable_mosaic.version = 11 : i64} {
  func.func @_fused_mlp_kernel(%arg0: memref<16x256xbf16, #tpu.memory_space<vmem>>, %arg1: memref<256x256xbf16, #tpu.memory_space<vmem>>, %arg2: memref<1x256xbf16, #tpu.memory_space<vmem>>, %arg3: memref<256x256xbf16, #tpu.memory_space<vmem>>, %arg4: memref<1x256xbf16, #tpu.memory_space<vmem>>, %arg5: memref<256x256xbf16, #tpu.memory_space<vmem>>, %arg6: memref<1x256xbf16, #tpu.memory_space<vmem>>, %arg7: memref<16x256xbf16, #tpu.memory_space<vmem>>) attributes {dimension_semantics = [], scalar_prefetch = 0 : i64, scratch_operands = 0 : i64, tpu.core_type = #tpu.core_type<tc>} {
    %c0 = arith.constant 0 : index
    %c0_0 = arith.constant 0 : index
    %0 = vector.load %arg0[%c0, %c0_0] : memref<16x256xbf16, #tpu.memory_space<vmem>>, vector<16x256xbf16>
    %c0_1 = arith.constant 0 : index
    %c0_2 = arith.constant 0 : index
    %1 = vector.load %arg1[%c0_1, %c0_2] : memref<256x256xbf16, #tpu.memory_space<vmem>>, vector<256x256xbf16>
    %c0_3 = arith.constant 0 : index
    %c0_4 = arith.constant 0 : index
    %2 = vector.load %arg2[%c0_3, %c0_4] : memref<1x256xbf16, #tpu.memory_space<vmem>>, vector<1x256xbf16>
    %cst = arith.constant dense<0.000000e+00> : vector<16x256xf32>
    %3 = tpu.matmul %0, %1, %cst {dimension_numbers = #tpu.dot_dimension_numbers<[1], [0], [0], [1], [0, 0, 1, 1], [], []>} : vector<16x256xbf16>, vector<256x256xbf16>, vector<16x256xf32> -> vector<16x256xf32>
    %4 = arith.truncf %3 : vector<16x256xf32> to vector<16x256xbf16>
    %5 = vector.broadcast %2 : vector<1x256xbf16> to vector<16x256xbf16>
    %6 = arith.addf %4, %5 : vector<16x256xbf16>
    %cst_5 = arith.constant 0.000000e+00 : bf16
    %7 = vector.broadcast %cst_5 : bf16 to vector<16x256xbf16>
    %8 = arith.maximumf %6, %7 : vector<16x256xbf16>
    %c0_6 = arith.constant 0 : index
    %c0_7 = arith.constant 0 : index
    %9 = vector.load %arg3[%c0_6, %c0_7] : memref<256x256xbf16, #tpu.memory_space<vmem>>, vector<256x256xbf16>
    %c0_8 = arith.constant 0 : index
    %c0_9 = arith.constant 0 : index
    %10 = vector.load %arg4[%c0_8, %c0_9] : memref<1x256xbf16, #tpu.memory_space<vmem>>, vector<1x256xbf16>
    %cst_10 = arith.constant dense<0.000000e+00> : vector<16x256xf32>
    %11 = tpu.matmul %8, %9, %cst_10 {dimension_numbers = #tpu.dot_dimension_numbers<[1], [0], [0], [1], [0, 0, 1, 1], [], []>} : vector<16x256xbf16>, vector<256x256xbf16>, vector<16x256xf32> -> vector<16x256xf32>
    %12 = arith.truncf %11 : vector<16x256xf32> to vector<16x256xbf16>
    %13 = vector.broadcast %10 : vector<1x256xbf16> to vector<16x256xbf16>
    %14 = arith.addf %12, %13 : vector<16x256xbf16>
    %cst_11 = arith.constant 0.000000e+00 : bf16
    %15 = vector.broadcast %cst_11 : bf16 to vector<16x256xbf16>
    %16 = arith.maximumf %14, %15 : vector<16x256xbf16>
    %c0_12 = arith.constant 0 : index
    %c0_13 = arith.constant 0 : index
    %17 = vector.load %arg5[%c0_12, %c0_13] : memref<256x256xbf16, #tpu.memory_space<vmem>>, vector<256x256xbf16>
    %c0_14 = arith.constant 0 : index
    %c0_15 = arith.constant 0 : index
    %18 = vector.load %arg6[%c0_14, %c0_15] : memref<1x256xbf16, #tpu.memory_space<vmem>>, vector<1x256xbf16>
    %cst_16 = arith.constant dense<0.000000e+00> : vector<16x256xf32>
    %19 = tpu.matmul %16, %17, %cst_16 {dimension_numbers = #tpu.dot_dimension_numbers<[1], [0], [0], [1], [0, 0, 1, 1], [], []>} : vector<16x256xbf16>, vector<256x256xbf16>, vector<16x256xf32> -> vector<16x256xf32>
    %20 = arith.truncf %19 : vector<16x256xf32> to vector<16x256xbf16>
    %21 = vector.broadcast %18 : vector<1x256xbf16> to vector<16x256xbf16>
    %22 = arith.addf %20, %21 : vector<16x256xbf16>
    %c0_17 = arith.constant 0 : index
    %c0_18 = arith.constant 0 : index
    %23 = vector.load %arg7[%c0_17, %c0_18] : memref<16x256xbf16, #tpu.memory_space<vmem>>, vector<16x256xbf16>
    tpu.vector_store %arg7[%c0_17, %c0_18], %22 {strides = array<i32>} : memref<16x256xbf16, #tpu.memory_space<vmem>>, vector<16x256xbf16>,
    return
  }
}

</mosaic_0001>

<llo_original>
// kernel: fwd.1
$region0: #{fwd.1}
  #allocation0 [shape = 'u32[]', space=smem, size = 0x4, offset = 0x4, fixed_abs, tag = 'smem constant byte address 0x4 - core index']
  #allocation1 [shape = 'u32[144,128]{1,0:T(1,128)}', space=vmem, size = 0x12000, scoped, tag = 'internal scratch']
  %s0 = inlined_call_operand.vmem [shape: bf16[16,256], index: 0, kind: input, shape index: {}]
  %s1 = inlined_call_operand.hbm [shape: bf16[256,256], index: 1, kind: input, shape index: {}]
  %s2 = inlined_call_operand.vmem [shape: bf16[1,256], index: 2, kind: input, shape index: {}]
  %s3 = inlined_call_operand.hbm [shape: bf16[256,256], index: 3, kind: input, shape index: {}]
  %s4 = inlined_call_operand.vmem [shape: bf16[1,256], index: 4, kind: input, shape index: {}]
  %s5 = inlined_call_operand.hbm [shape: bf16[256,256], index: 5, kind: input, shape index: {}]
  %s6 = inlined_call_operand.vmem [shape: bf16[1,256], index: 6, kind: input, shape index: {}]
  %s7 = inlined_call_operand.vmem [shape: bf16[16,256], index: 7, kind: output, shape index: {}]
  %s8 = sld [smem:[#allocation0]]
  $region50: #{fwd.1} parent=0
    _
  %s10 = ssub.s32 1, %s8
  %s11 = scalar_select 0, %s10, %s8
  $region1: #{fwd.1} parent=0
    #allocation2 [shape = 'u8[131072]{0}', space=vmem, size = 0x20000, scoped, tag = 'input window, operand 1, single buffered']
    #allocation3 [shape = 's32[1]{0}', space=sflag, size = 0x4, scoped, tag = 'scoped memory for fwd.1']
    #allocation4 [shape = 'u8[131072]{0}', space=vmem, size = 0x20000, scoped, tag = 'input window, operand 3, single buffered']
    #allocation5 [shape = 's32[1]{0}', space=sflag, size = 0x4, scoped, tag = 'scoped memory for fwd.1']
    #allocation6 [shape = 'u8[131072]{0}', space=vmem, size = 0x20000, scoped, tag = 'input window, operand 5, single buffered']
    %12 = vsyncpa [#allocation3], 0
    %13 = vsyncpa [#allocation5], 0
    // Predicated region
    $region2: #{fwd.1} parent=1 // pred_check
      _
    $region3: #{fwd.1} parent=1 // pred_check_branch
      %15 = sbr.rel (0) target = $region5
    $region4: #{fwd.1} parent=1 // pred_region
      _
    $region5: #{fwd.1} parent=1 // pred_fallthru
      _
    // Predicated region
    $region6: #{fwd.1} parent=1 // pred_check
      _
    $region7: #{fwd.1} parent=1 // pred_check_branch
      %17 = sbr.rel (0) target = $region9
    $region8: #{fwd.1} parent=1 // pred_region
      %s19 = ssub.s32 4096, 4096
      %20 = vsyncadd [#allocation3], %s19
      %s21 = sshll.u32 [#allocation2], 4
      %s22 = int_to_ptr.vmem [resolvable:$true] %s21
      %27 = dma.hbm_to_vmem [thread:$0]  %s1, 4096, %s22, [#allocation3], 128, 128, 8
    $region9: #{fwd.1} parent=1 // pred_fallthru
      _
    // Predicated region
    $region10: #{fwd.1} parent=1 // pred_check
      _
    $region11: #{fwd.1} parent=1 // pred_check_branch
      %29 = sbr.rel (0) target = $region13
    $region12: #{fwd.1} parent=1 // pred_region
      _
    $region13: #{fwd.1} parent=1 // pred_fallthru
      _
    // Predicated region
    $region14: #{fwd.1} parent=1 // pred_check
      _
    $region15: #{fwd.1} parent=1 // pred_check_branch
      %31 = sbr.rel (0) target = $region17
    $region16: #{fwd.1} parent=1 // pred_region
      %s33 = ssub.s32 4096, 4096
      %34 = vsyncadd [#allocation5], %s33
      %s35 = sshll.u32 [#allocation4], 4
      %s36 = int_to_ptr.vmem [resolvable:$true] %s35
      %41 = dma.hbm_to_vmem [thread:$0]  %s3, 4096, %s36, [#allocation5], 128, 128, 8
    $region17: #{fwd.1} parent=1 // pred_fallthru
      _
    // Predicated region
    $region18: #{fwd.1} parent=1 // pred_check
      _
    $region19: #{fwd.1} parent=1 // pred_check_branch
      %43 = sbr.rel (0) target = $region21
    $region20: #{fwd.1} parent=1 // pred_region
      _
    $region21: #{fwd.1} parent=1 // pred_fallthru
      _
    // Predicated region
    $region22: #{fwd.1} parent=1 // pred_check
      _
    $region23: #{fwd.1} parent=1 // pred_check_branch
      %45 = sbr.rel (0) target = $region25
    $region24: #{fwd.1} parent=1 // pred_region
      %s47 = ssub.s32 4096, 4096
      %48 = vsyncadd [#allocation5], %s47
      %s49 = sshll.u32 [#allocation6], 4
      %s50 = int_to_ptr.vmem [resolvable:$true] %s49
      %55 = dma.hbm_to_vmem [thread:$0]  %s5, 4096, %s50, [#allocation5], 128, 128, 8
    $region25: #{fwd.1} parent=1 // pred_fallthru
      _
    // Predicated region
    $region26: #{fwd.1} parent=1 // pred_check
      _
    $region27: #{fwd.1} parent=1 // pred_check_branch
      %57 = sbr.rel (0) target = $region29
    $region28: #{fwd.1} parent=1 // pred_region
      _
    $region29: #{fwd.1} parent=1 // pred_fallthru
      _
    // Predicated region
    $region30: #{fwd.1} parent=1 // pred_check
      _
    $region31: #{fwd.1} parent=1 // pred_check_branch
      %59 = sbr.rel (0) target = $region33
    $region32: #{fwd.1} parent=1 // pred_region
      %60 = dma.done [#allocation3], 4096
    $region33: #{fwd.1} parent=1 // pred_fallthru
      _
    // Predicated region
    $region34: #{fwd.1} parent=1 // pred_check
      _
    $region35: #{fwd.1} parent=1 // pred_check_branch
      %62 = sbr.rel (0) target = $region37
    $region36: #{fwd.1} parent=1 // pred_region
      %63 = dma.done [#allocation5], 4096
    $region37: #{fwd.1} parent=1 // pred_fallthru
      _
    // Predicated region
    $region38: #{fwd.1} parent=1 // pred_check
      _
    $region39: #{fwd.1} parent=1 // pred_check_branch
      %65 = sbr.rel (0) target = $region41
    $region40: #{fwd.1} parent=1 // pred_region
      %66 = dma.done [#allocation5], 4096
    $region41: #{fwd.1} parent=1 // pred_fallthru
      _
    %v68 = vld [vmem:[%s0] sm:$0xff]
    %v69 = vld [vmem:[%s0 + $0x8] sm:$0xff]
    %v70 = vld [vmem:[#allocation2] sm:$0xff]
    %v71 = vld [vmem:[#allocation2 + $0x8] sm:$0xff]
    %v72 = vld [vmem:[#allocation2 + $0x10] sm:$0xff]
    %v73 = vld [vmem:[#allocation2 + $0x18] sm:$0xff]
    %v74 = vld [vmem:[#allocation2 + $0x20] sm:$0xff]
    %v75 = vld [vmem:[#allocation2 + $0x28] sm:$0xff]
    %v76 = vld [vmem:[#allocation2 + $0x30] sm:$0xff]
    %v77 = vld [vmem:[#allocation2 + $0x38] sm:$0xff]
    %v78 = vld [vmem:[#allocation2 + $0x40] sm:$0xff]
    %v79 = vld [vmem:[#allocation2 + $0x48] sm:$0xff]
    %v80 = vld [vmem:[#allocation2 + $0x50] sm:$0xff]
    %v81 = vld [vmem:[#allocation2 + $0x58] sm:$0xff]
    %v82 = vld [vmem:[#allocation2 + $0x60] sm:$0xff]
    %v83 = vld [vmem:[#allocation2 + $0x68] sm:$0xff]
    %v84 = vld [vmem:[#allocation2 + $0x70] sm:$0xff]
    %v85 = vld [vmem:[#allocation2 + $0x78] sm:$0xff]
    %v86 = vld [vmem:[#allocation2 + $0x80] sm:$0xff]
    %v87 = vld [vmem:[#allocation2 + $0x88] sm:$0xff]
    %v88 = vld [vmem:[#allocation2 + $0x90] sm:$0xff]
    %v89 = vld [vmem:[#allocation2 + $0x98] sm:$0xff]
    %v90 = vld [vmem:[#allocation2 + $0xa0] sm:$0xff]
    %v91 = vld [vmem:[#allocation2 + $0xa8] sm:$0xff]
    %v92 = vld [vmem:[#allocation2 + $0xb0] sm:$0xff]
    %v93 = vld [vmem:[#allocation2 + $0xb8] sm:$0xff]
    %v94 = vld [vmem:[#allocation2 + $0xc0] sm:$0xff]
    %v95 = vld [vmem:[#allocation2 + $0xc8] sm:$0xff]
    %v96 = vld [vmem:[#allocation2 + $0xd0] sm:$0xff]
    %v97 = vld [vmem:[#allocation2 + $0xd8] sm:$0xff]
    %v98 = vld [vmem:[#allocation2 + $0xe0] sm:$0xff]
    %v99 = vld [vmem:[#allocation2 + $0xe8] sm:$0xff]
    %v100 = vld [vmem:[#allocation2 + $0xf0] sm:$0xff]
    %v101 = vld [vmem:[#allocation2 + $0xf8] sm:$0xff]
    %v102 = vld [vmem:[%s2] sm:$0x3]
    %v105 = vunpack.c.l.b16 %v68
    %v106 = vunpack.c.h.b16 %v68
    %v107 = vunpack.c.l.b16 %v69
    %v108 = vunpack.c.h.b16 %v69
    %v109 = vpack.c.b16 %v107, %v105
    %v110 = vpack.c.b16 %v108, %v106
    %v145 = vunpack.c.l.b16 %v70
    %v146 = vunpack.c.h.b16 %v70
    %v147 = vunpack.c.l.b16 %v71
    %v148 = vunpack.c.h.b16 %v71
    %v149 = vunpack.c.l.b16 %v72
    %v150 = vunpack.c.h.b16 %v72
    %v151 = vunpack.c.l.b16 %v73
    %v152 = vunpack.c.h.b16 %v73
    %v153 = vunpack.c.l.b16 %v74
    %v154 = vunpack.c.h.b16 %v74
    %v155 = vunpack.c.l.b16 %v75
    %v156 = vunpack.c.h.b16 %v75
    %v157 = vunpack.c.l.b16 %v76
    %v158 = vunpack.c.h.b16 %v76
    %v159 = vunpack.c.l.b16 %v77
    %v160 = vunpack.c.h.b16 %v77
    %v161 = vunpack.c.l.b16 %v78
    %v162 = vunpack.c.h.b16 %v78
    %v163 = vunpack.c.l.b16 %v79
    %v164 = vunpack.c.h.b16 %v79
    %v165 = vunpack.c.l.b16 %v80
    %v166 = vunpack.c.h.b16 %v80
    %v167 = vunpack.c.l.b16 %v81
    %v168 = vunpack.c.h.b16 %v81
    %v169 = vunpack.c.l.b16 %v82
    %v170 = vunpack.c.h.b16 %v82
    %v171 = vunpack.c.l.b16 %v83
    %v172 = vunpack.c.h.b16 %v83
    %v173 = vunpack.c.l.b16 %v84
    %v174 = vunpack.c.h.b16 %v84
    %v175 = vunpack.c.l.b16 %v85
    %v176 = vunpack.c.h.b16 %v85
    %v177 = vunpack.c.l.b16 %v86
    %v178 = vunpack.c.h.b16 %v86
    %v179 = vunpack.c.l.b16 %v87
    %v180 = vunpack.c.h.b16 %v87
    %v181 = vunpack.c.l.b16 %v88
    %v182 = vunpack.c.h.b16 %v88
    %v183 = vunpack.c.l.b16 %v89
    %v184 = vunpack.c.h.b16 %v89
    %v185 = vunpack.c.l.b16 %v90
    %v186 = vunpack.c.h.b16 %v90
    %v187 = vunpack.c.l.b16 %v91
    %v188 = vunpack.c.h.b16 %v91
    %v189 = vunpack.c.l.b16 %v92
    %v190 = vunpack.c.h.b16 %v92
    %v191 = vunpack.c.l.b16 %v93
    %v192 = vunpack.c.h.b16 %v93
    %v193 = vunpack.c.l.b16 %v94
    %v194 = vunpack.c.h.b16 %v94
    %v195 = vunpack.c.l.b16 %v95
    %v196 = vunpack.c.h.b16 %v95
    %v197 = vunpack.c.l.b16 %v96
    %v198 = vunpack.c.h.b16 %v96
    %v199 = vunpack.c.l.b16 %v97
    %v200 = vunpack.c.h.b16 %v97
    %v201 = vunpack.c.l.b16 %v98
    %v202 = vunpack.c.h.b16 %v98
    %v203 = vunpack.c.l.b16 %v99
    %v204 = vunpack.c.h.b16 %v99
    %v205 = vunpack.c.l.b16 %v100
    %v206 = vunpack.c.h.b16 %v100
    %v207 = vunpack.c.l.b16 %v101
    %v208 = vunpack.c.h.b16 %v101
    %v209 = vpack.c.b16 %v147, %v145
    %v210 = vpack.c.b16 %v148, %v146
    %v211 = vpack.c.b16 %v151, %v149
    %v212 = vpack.c.b16 %v152, %v150
    %v213 = vpack.c.b16 %v155, %v153
    %v214 = vpack.c.b16 %v156, %v154
    %v215 = vpack.c.b16 %v159, %v157
    %v216 = vpack.c.b16 %v160, %v158
    %v217 = vpack.c.b16 %v163, %v161
    %v218 = vpack.c.b16 %v164, %v162
    %v219 = vpack.c.b16 %v167, %v165
    %v220 = vpack.c.b16 %v168, %v166
    %v221 = vpack.c.b16 %v171, %v169
    %v222 = vpack.c.b16 %v172, %v170
    %v223 = vpack.c.b16 %v175, %v173
    %v224 = vpack.c.b16 %v176, %v174
    %v225 = vpack.c.b16 %v179, %v177
    %v226 = vpack.c.b16 %v180, %v178
    %v227 = vpack.c.b16 %v183, %v181
    %v228 = vpack.c.b16 %v184, %v182
    %v229 = vpack.c.b16 %v187, %v185
    %v230 = vpack.c.b16 %v188, %v186
    %v231 = vpack.c.b16 %v191, %v189
    %v232 = vpack.c.b16 %v192, %v190
    %v233 = vpack.c.b16 %v195, %v193
    %v234 = vpack.c.b16 %v196, %v194
    %v235 = vpack.c.b16 %v199, %v197
    %v236 = vpack.c.b16 %v200, %v198
    %v237 = vpack.c.b16 %v203, %v201
    %v238 = vpack.c.b16 %v204, %v202
    %v239 = vpack.c.b16 %v207, %v205
    %v240 = vpack.c.b16 %v208, %v206
    %273 = vmatprep.subr.bf16.mxu0 %v210
    %274 = vmatpush1.bf16.msra.mxu0 %v209
    %275 = vmatprep.subr.bf16.mxu0 %v212
    %276 = vmatpush1.bf16.msra.mxu0 %v211
    %277 = vmatprep.subr.bf16.mxu0 %v214
    %278 = vmatpush1.bf16.msra.mxu0 %v213
    %279 = vmatprep.subr.bf16.mxu0 %v216
    %280 = vmatpush1.bf16.msra.mxu0 %v215
    %281 = vmatprep.subr.bf16.mxu0 %v218
    %282 = vmatpush1.bf16.msra.mxu0 %v217
    %283 = vmatprep.subr.bf16.mxu0 %v220
    %284 = vmatpush1.bf16.msra.mxu0 %v219
    %285 = vmatprep.subr.bf16.mxu0 %v222
    %286 = vmatpush1.bf16.msra.mxu0 %v221
    %287 = vmatprep.subr.bf16.mxu0 %v224
    %288 = vmatpush1.bf16.msra.mxu0 %v223
    %289 = vmatprep.subr.bf16.mxu0 %v226
    %290 = vmatpush1.bf16.msra.mxu0 %v225
    %291 = vmatprep.subr.bf16.mxu0 %v228
    %292 = vmatpush1.bf16.msra.mxu0 %v227
    %293 = vmatprep.subr.bf16.mxu0 %v230
    %294 = vmatpush1.bf16.msra.mxu0 %v229
    %295 = vmatprep.subr.bf16.mxu0 %v232
    %296 = vmatpush1.bf16.msra.mxu0 %v231
    %297 = vmatprep.subr.bf16.mxu0 %v234
    %298 = vmatpush1.bf16.msra.mxu0 %v233
    %299 = vmatprep.subr.bf16.mxu0 %v236
    %300 = vmatpush1.bf16.msra.mxu0 %v235
    %301 = vmatprep.subr.bf16.mxu0 %v238
    %302 = vmatpush1.bf16.msra.mxu0 %v237
    %303 = vmatprep.subr.bf16.mxu0 %v240
    %304 = vmatpush1.bf16.msra.mxu0 %v239
    %305 = vmatprep.mubr.bf16.mxu0 %v110
    %306 = vmatmul.mubr.bf16.gmra.mrb[0].mxu0 %v109
    %v307 = vpop.f32.mrb[0].mxu0
    %v308 = vadd.f32 0.0, %v307
    %v309 = vpop.f32.mrb[0].mxu0
    %v310 = vadd.f32 0.0, %v309
    %v311 = vpop.f32.mrb[0].mxu0
    %v312 = vadd.f32 0.0, %v311
    %v313 = vpop.f32.mrb[0].mxu0
    %v314 = vadd.f32 0.0, %v313
    %315 = vdwg.mxu0
    %v316 = vpack.c.bf16 %v312, %v308
    %v317 = vpack.c.bf16 %v314, %v310
    %v320 = vunpack.c.l.s4 1966171168
    %v321 = vunpack.c.0.s8 %v320
    %v322 = vlaneseq
    %v323 = vshrl.u32 %v322, 7
    %v324 = vsub.s32 %v321, %v323
    %v325 = vrot.slane %v102, %v324
    %v326 = vcombine.high %v325, %v325
    %v328 = vunpack.c.l.s4 1966171168
    %v329 = vunpack.c.0.s8 %v328
    %v330 = vlaneseq
    %v331 = vshrl.u32 %v330, 7
    %v332 = vsub.s32 %v329, %v331
    %v333 = vrot.slane %v325, %v332
    %v335 = vunpack.c.l.s4 1966171168
    %v336 = vunpack.c.0.s8 %v335
    %v337 = vlaneseq
    %v338 = vshrl.u32 %v337, 7
    %v339 = vsub.s32 %v336, %v338
    %v340 = vrot.slane %v326, %v339
    %v342 = vpack.i.b16 %v333, %v333
    %v344 = vlaneseq
    %v345 = vshrl.u32 %v344, 7
    %v346 = vsub.s32 0, %v345
    %v347 = vrot.slane %v342, %v346
    %v349 = vpack.i.b16 %v340, %v340
    %v351 = vlaneseq
    %v352 = vshrl.u32 %v351, 7
    %v353 = vsub.s32 0, %v352
    %v354 = vrot.slane %v349, %v353
    %v355 = vadd.bf16 %v316, %v347
    %v356 = vadd.bf16 %v317, %v354
    %v357 = vmax.bf16 %v355, 0
    %v358 = vmax.bf16 %v356, 0
    %v359 = vld [vmem:[#allocation4] sm:$0xff]
    %v360 = vld [vmem:[#allocation4 + $0x8] sm:$0xff]
    %v361 = vld [vmem:[#allocation4 + $0x10] sm:$0xff]
    %v362 = vld [vmem:[#allocation4 + $0x18] sm:$0xff]
    %v363 = vld [vmem:[#allocation4 + $0x20] sm:$0xff]
    %v364 = vld [vmem:[#allocation4 + $0x28] sm:$0xff]
    %v365 = vld [vmem:[#allocation4 + $0x30] sm:$0xff]
    %v366 = vld [vmem:[#allocation4 + $0x38] sm:$0xff]
    %v367 = vld [vmem:[#allocation4 + $0x40] sm:$0xff]
    %v368 = vld [vmem:[#allocation4 + $0x48] sm:$0xff]
    %v369 = vld [vmem:[#allocation4 + $0x50] sm:$0xff]
    %v370 = vld [vmem:[#allocation4 + $0x58] sm:$0xff]
    %v371 = vld [vmem:[#allocation4 + $0x60] sm:$0xff]
    %v372 = vld [vmem:[#allocation4 + $0x68] sm:$0xff]
    %v373 = vld [vmem:[#allocation4 + $0x70] sm:$0xff]
    %v374 = vld [vmem:[#allocation4 + $0x78] sm:$0xff]
    %v375 = vld [vmem:[#allocation4 + $0x80] sm:$0xff]
    %v376 = vld [vmem:[#allocation4 + $0x88] sm:$0xff]
    %v377 = vld [vmem:[#allocation4 + $0x90] sm:$0xff]
    %v378 = vld [vmem:[#allocation4 + $0x98] sm:$0xff]
    %v379 = vld [vmem:[#allocation4 + $0xa0] sm:$0xff]
    %v380 = vld [vmem:[#allocation4 + $0xa8] sm:$0xff]
    %v381 = vld [vmem:[#allocation4 + $0xb0] sm:$0xff]
    %v382 = vld [vmem:[#allocation4 + $0xb8] sm:$0xff]
    %v383 = vld [vmem:[#allocation4 + $0xc0] sm:$0xff]
    %v384 = vld [vmem:[#allocation4 + $0xc8] sm:$0xff]
    %v385 = vld [vmem:[#allocation4 + $0xd0] sm:$0xff]
    %v386 = vld [vmem:[#allocation4 + $0xd8] sm:$0xff]
    %v387 = vld [vmem:[#allocation4 + $0xe0] sm:$0xff]
    %v388 = vld [vmem:[#allocation4 + $0xe8] sm:$0xff]
    %v389 = vld [vmem:[#allocation4 + $0xf0] sm:$0xff]
    %v390 = vld [vmem:[#allocation4 + $0xf8] sm:$0xff]
    %v391 = vld [vmem:[%s4] sm:$0x3]
    %v424 = vunpack.c.l.b16 %v359
    %v425 = vunpack.c.h.b16 %v359
    %v426 = vunpack.c.l.b16 %v360
    %v427 = vunpack.c.h.b16 %v360
    %v428 = vunpack.c.l.b16 %v361
    %v429 = vunpack.c.h.b16 %v361
    %v430 = vunpack.c.l.b16 %v362
    %v431 = vunpack.c.h.b16 %v362
    %v432 = vunpack.c.l.b16 %v363
    %v433 = vunpack.c.h.b16 %v363
    %v434 = vunpack.c.l.b16 %v364
    %v435 = vunpack.c.h.b16 %v364
    %v436 = vunpack.c.l.b16 %v365
    %v437 = vunpack.c.h.b16 %v365
    %v438 = vunpack.c.l.b16 %v366
    %v439 = vunpack.c.h.b16 %v366
    %v440 = vunpack.c.l.b16 %v367
    %v441 = vunpack.c.h.b16 %v367
    %v442 = vunpack.c.l.b16 %v368
    %v443 = vunpack.c.h.b16 %v368
    %v444 = vunpack.c.l.b16 %v369
    %v445 = vunpack.c.h.b16 %v369
    %v446 = vunpack.c.l.b16 %v370
    %v447 = vunpack.c.h.b16 %v370
    %v448 = vunpack.c.l.b16 %v371
    %v449 = vunpack.c.h.b16 %v371
    %v450 = vunpack.c.l.b16 %v372
    %v451 = vunpack.c.h.b16 %v372
    %v452 = vunpack.c.l.b16 %v373
    %v453 = vunpack.c.h.b16 %v373
    %v454 = vunpack.c.l.b16 %v374
    %v455 = vunpack.c.h.b16 %v374
    %v456 = vunpack.c.l.b16 %v375
    %v457 = vunpack.c.h.b16 %v375
    %v458 = vunpack.c.l.b16 %v376
    %v459 = vunpack.c.h.b16 %v376
    %v460 = vunpack.c.l.b16 %v377
    %v461 = vunpack.c.h.b16 %v377
    %v462 = vunpack.c.l.b16 %v378
    %v463 = vunpack.c.h.b16 %v378
    %v464 = vunpack.c.l.b16 %v379
    %v465 = vunpack.c.h.b16 %v379
    %v466 = vunpack.c.l.b16 %v380
    %v467 = vunpack.c.h.b16 %v380
    %v468 = vunpack.c.l.b16 %v381
    %v469 = vunpack.c.h.b16 %v381
    %v470 = vunpack.c.l.b16 %v382
    %v471 = vunpack.c.h.b16 %v382
    %v472 = vunpack.c.l.b16 %v383
    %v473 = vunpack.c.h.b16 %v383
    %v474 = vunpack.c.l.b16 %v384
    %v475 = vunpack.c.h.b16 %v384
    %v476 = vunpack.c.l.b16 %v385
    %v477 = vunpack.c.h.b16 %v385
    %v478 = vunpack.c.l.b16 %v386
    %v479 = vunpack.c.h.b16 %v386
    %v480 = vunpack.c.l.b16 %v387
    %v481 = vunpack.c.h.b16 %v387
    %v482 = vunpack.c.l.b16 %v388
    %v483 = vunpack.c.h.b16 %v388
    %v484 = vunpack.c.l.b16 %v389
    %v485 = vunpack.c.h.b16 %v389
    %v486 = vunpack.c.l.b16 %v390
    %v487 = vunpack.c.h.b16 %v390
    %v488 = vpack.c.b16 %v426, %v424
    %v489 = vpack.c.b16 %v427, %v425
    %v490 = vpack.c.b16 %v430, %v428
    %v491 = vpack.c.b16 %v431, %v429
    %v492 = vpack.c.b16 %v434, %v432
    %v493 = vpack.c.b16 %v435, %v433
    %v494 = vpack.c.b16 %v438, %v436
    %v495 = vpack.c.b16 %v439, %v437
    %v496 = vpack.c.b16 %v442, %v440
    %v497 = vpack.c.b16 %v443, %v441
    %v498 = vpack.c.b16 %v446, %v444
    %v499 = vpack.c.b16 %v447, %v445
    %v500 = vpack.c.b16 %v450, %v448
    %v501 = vpack.c.b16 %v451, %v449
    %v502 = vpack.c.b16 %v454, %v452
    %v503 = vpack.c.b16 %v455, %v453
    %v504 = vpack.c.b16 %v458, %v456
    %v505 = vpack.c.b16 %v459, %v457
    %v506 = vpack.c.b16 %v462, %v460
    %v507 = vpack.c.b16 %v463, %v461
    %v508 = vpack.c.b16 %v466, %v464
    %v509 = vpack.c.b16 %v467, %v465
    %v510 = vpack.c.b16 %v470, %v468
    %v511 = vpack.c.b16 %v471, %v469
    %v512 = vpack.c.b16 %v474, %v472
    %v513 = vpack.c.b16 %v475, %v473
    %v514 = vpack.c.b16 %v478, %v476
    %v515 = vpack.c.b16 %v479, %v477
    %v516 = vpack.c.b16 %v482, %v480
    %v517 = vpack.c.b16 %v483, %v481
    %v518 = vpack.c.b16 %v486, %v484
    %v519 = vpack.c.b16 %v487, %v485
    %552 = vmatprep.subr.bf16.mxu0 %v489
    %553 = vmatpush1.bf16.msra.mxu0 %v488
    %554 = vmatprep.subr.bf16.mxu0 %v491
    %555 = vmatpush1.bf16.msra.mxu0 %v490
    %556 = vmatprep.subr.bf16.mxu0 %v493
    %557 = vmatpush1.bf16.msra.mxu0 %v492
    %558 = vmatprep.subr.bf16.mxu0 %v495
    %559 = vmatpush1.bf16.msra.mxu0 %v494
    %560 = vmatprep.subr.bf16.mxu0 %v497
    %561 = vmatpush1.bf16.msra.mxu0 %v496
    %562 = vmatprep.subr.bf16.mxu0 %v499
    %563 = vmatpush1.bf16.msra.mxu0 %v498
    %564 = vmatprep.subr.bf16.mxu0 %v501
    %565 = vmatpush1.bf16.msra.mxu0 %v500
    %566 = vmatprep.subr.bf16.mxu0 %v503
    %567 = vmatpush1.bf16.msra.mxu0 %v502
    %568 = vmatprep.subr.bf16.mxu0 %v505
    %569 = vmatpush1.bf16.msra.mxu0 %v504
    %570 = vmatprep.subr.bf16.mxu0 %v507
    %571 = vmatpush1.bf16.msra.mxu0 %v506
    %572 = vmatprep.subr.bf16.mxu0 %v509
    %573 = vmatpush1.bf16.msra.mxu0 %v508
    %574 = vmatprep.subr.bf16.mxu0 %v511
    %575 = vmatpush1.bf16.msra.mxu0 %v510
    %576 = vmatprep.subr.bf16.mxu0 %v513
    %577 = vmatpush1.bf16.msra.mxu0 %v512
    %578 = vmatprep.subr.bf16.mxu0 %v515
    %579 = vmatpush1.bf16.msra.mxu0 %v514
    %580 = vmatprep.subr.bf16.mxu0 %v517
    %581 = vmatpush1.bf16.msra.mxu0 %v516
    %582 = vmatprep.subr.bf16.mxu0 %v519
    %583 = vmatpush1.bf16.msra.mxu0 %v518
    %584 = vmatprep.mubr.bf16.mxu0 %v358
    %585 = vmatmul.mubr.bf16.gmra.mrb[0].mxu0 %v357
    %v586 = vpop.f32.mrb[0].mxu0
    %v587 = vadd.f32 0.0, %v586
    %v588 = vpop.f32.mrb[0].mxu0
    %v589 = vadd.f32 0.0, %v588
    %v590 = vpop.f32.mrb[0].mxu0
    %v591 = vadd.f32 0.0, %v590
    %v592 = vpop.f32.mrb[0].mxu0
    %v593 = vadd.f32 0.0, %v592
    %594 = vdwg.mxu0
    %v595 = vpack.c.bf16 %v591, %v587
    %v596 = vpack.c.bf16 %v593, %v589
    %v599 = vunpack.c.l.s4 1966171168
    %v600 = vunpack.c.0.s8 %v599
    %v601 = vlaneseq
    %v602 = vshrl.u32 %v601, 7
    %v603 = vsub.s32 %v600, %v602
    %v604 = vrot.slane %v391, %v603
    %v605 = vcombine.high %v604, %v604
    %v607 = vunpack.c.l.s4 1966171168
    %v608 = vunpack.c.0.s8 %v607
    %v609 = vlaneseq
    %v610 = vshrl.u32 %v609, 7
    %v611 = vsub.s32 %v608, %v610
    %v612 = vrot.slane %v604, %v611
    %v614 = vunpack.c.l.s4 1966171168
    %v615 = vunpack.c.0.s8 %v614
    %v616 = vlaneseq
    %v617 = vshrl.u32 %v616, 7
    %v618 = vsub.s32 %v615, %v617
    %v619 = vrot.slane %v605, %v618
    %v621 = vpack.i.b16 %v612, %v612
    %v623 = vlaneseq
    %v624 = vshrl.u32 %v623, 7
    %v625 = vsub.s32 0, %v624
    %v626 = vrot.slane %v621, %v625
    %v628 = vpack.i.b16 %v619, %v619
    %v630 = vlaneseq
    %v631 = vshrl.u32 %v630, 7
    %v632 = vsub.s32 0, %v631
    %v633 = vrot.slane %v628, %v632
    %v634 = vadd.bf16 %v595, %v626
    %v635 = vadd.bf16 %v596, %v633
    %v636 = vmax.bf16 %v634, 0
    %v637 = vmax.bf16 %v635, 0
    %v638 = vld [vmem:[#allocation6] sm:$0xff]
    %v639 = vld [vmem:[#allocation6 + $0x8] sm:$0xff]
    %v640 = vld [vmem:[#allocation6 + $0x10] sm:$0xff]
    %v641 = vld [vmem:[#allocation6 + $0x18] sm:$0xff]
    %v642 = vld [vmem:[#allocation6 + $0x20] sm:$0xff]
    %v643 = vld [vmem:[#allocation6 + $0x28] sm:$0xff]
    %v644 = vld [vmem:[#allocation6 + $0x30] sm:$0xff]
    %v645 = vld [vmem:[#allocation6 + $0x38] sm:$0xff]
    %v646 = vld [vmem:[#allocation6 + $0x40] sm:$0xff]
    %v647 = vld [vmem:[#allocation6 + $0x48] sm:$0xff]
    %v648 = vld [vmem:[#allocation6 + $0x50] sm:$0xff]
    %v649 = vld [vmem:[#allocation6 + $0x58] sm:$0xff]
    %v650 = vld [vmem:[#allocation6 + $0x60] sm:$0xff]
    %v651 = vld [vmem:[#allocation6 + $0x68] sm:$0xff]
    %v652 = vld [vmem:[#allocation6 + $0x70] sm:$0xff]
    %v653 = vld [vmem:[#allocation6 + $0x78] sm:$0xff]
    %v654 = vld [vmem:[#allocation6 + $0x80] sm:$0xff]
    %v655 = vld [vmem:[#allocation6 + $0x88] sm:$0xff]
    %v656 = vld [vmem:[#allocation6 + $0x90] sm:$0xff]
    %v657 = vld [vmem:[#allocation6 + $0x98] sm:$0xff]
    %v658 = vld [vmem:[#allocation6 + $0xa0] sm:$0xff]
    %v659 = vld [vmem:[#allocation6 + $0xa8] sm:$0xff]
    %v660 = vld [vmem:[#allocation6 + $0xb0] sm:$0xff]
    %v661 = vld [vmem:[#allocation6 + $0xb8] sm:$0xff]
    %v662 = vld [vmem:[#allocation6 + $0xc0] sm:$0xff]
    %v663 = vld [vmem:[#allocation6 + $0xc8] sm:$0xff]
    %v664 = vld [vmem:[#allocation6 + $0xd0] sm:$0xff]
    %v665 = vld [vmem:[#allocation6 + $0xd8] sm:$0xff]
    %v666 = vld [vmem:[#allocation6 + $0xe0] sm:$0xff]
    %v667 = vld [vmem:[#allocation6 + $0xe8] sm:$0xff]
    %v668 = vld [vmem:[#allocation6 + $0xf0] sm:$0xff]
    %v669 = vld [vmem:[#allocation6 + $0xf8] sm:$0xff]
    %v670 = vld [vmem:[%s6] sm:$0x3]
    %v703 = vunpack.c.l.b16 %v638
    %v704 = vunpack.c.h.b16 %v638
    %v705 = vunpack.c.l.b16 %v639
    %v706 = vunpack.c.h.b16 %v639
    %v707 = vunpack.c.l.b16 %v640
    %v708 = vunpack.c.h.b16 %v640
    %v709 = vunpack.c.l.b16 %v641
    %v710 = vunpack.c.h.b16 %v641
    %v711 = vunpack.c.l.b16 %v642
    %v712 = vunpack.c.h.b16 %v642
    %v713 = vunpack.c.l.b16 %v643
    %v714 = vunpack.c.h.b16 %v643
    %v715 = vunpack.c.l.b16 %v644
    %v716 = vunpack.c.h.b16 %v644
    %v717 = vunpack.c.l.b16 %v645
    %v718 = vunpack.c.h.b16 %v645
    %v719 = vunpack.c.l.b16 %v646
    %v720 = vunpack.c.h.b16 %v646
    %v721 = vunpack.c.l.b16 %v647
    %v722 = vunpack.c.h.b16 %v647
    %v723 = vunpack.c.l.b16 %v648
    %v724 = vunpack.c.h.b16 %v648
    %v725 = vunpack.c.l.b16 %v649
    %v726 = vunpack.c.h.b16 %v649
    %v727 = vunpack.c.l.b16 %v650
    %v728 = vunpack.c.h.b16 %v650
    %v729 = vunpack.c.l.b16 %v651
    %v730 = vunpack.c.h.b16 %v651
    %v731 = vunpack.c.l.b16 %v652
    %v732 = vunpack.c.h.b16 %v652
    %v733 = vunpack.c.l.b16 %v653
    %v734 = vunpack.c.h.b16 %v653
    %v735 = vunpack.c.l.b16 %v654
    %v736 = vunpack.c.h.b16 %v654
    %v737 = vunpack.c.l.b16 %v655
    %v738 = vunpack.c.h.b16 %v655
    %v739 = vunpack.c.l.b16 %v656
    %v740 = vunpack.c.h.b16 %v656
    %v741 = vunpack.c.l.b16 %v657
    %v742 = vunpack.c.h.b16 %v657
    %v743 = vunpack.c.l.b16 %v658
    %v744 = vunpack.c.h.b16 %v658
    %v745 = vunpack.c.l.b16 %v659
    %v746 = vunpack.c.h.b16 %v659
    %v747 = vunpack.c.l.b16 %v660
    %v748 = vunpack.c.h.b16 %v660
    %v749 = vunpack.c.l.b16 %v661
    %v750 = vunpack.c.h.b16 %v661
    %v751 = vunpack.c.l.b16 %v662
    %v752 = vunpack.c.h.b16 %v662
    %v753 = vunpack.c.l.b16 %v663
    %v754 = vunpack.c.h.b16 %v663
    %v755 = vunpack.c.l.b16 %v664
    %v756 = vunpack.c.h.b16 %v664
    %v757 = vunpack.c.l.b16 %v665
    %v758 = vunpack.c.h.b16 %v665
    %v759 = vunpack.c.l.b16 %v666
    %v760 = vunpack.c.h.b16 %v666
    %v761 = vunpack.c.l.b16 %v667
    %v762 = vunpack.c.h.b16 %v667
    %v763 = vunpack.c.l.b16 %v668
    %v764 = vunpack.c.h.b16 %v668
    %v765 = vunpack.c.l.b16 %v669
    %v766 = vunpack.c.h.b16 %v669
    %v767 = vpack.c.b16 %v705, %v703
    %v768 = vpack.c.b16 %v706, %v704
    %v769 = vpack.c.b16 %v709, %v707
    %v770 = vpack.c.b16 %v710, %v708
    %v771 = vpack.c.b16 %v713, %v711
    %v772 = vpack.c.b16 %v714, %v712
    %v773 = vpack.c.b16 %v717, %v715
    %v774 = vpack.c.b16 %v718, %v716
    %v775 = vpack.c.b16 %v721, %v719
    %v776 = vpack.c.b16 %v722, %v720
    %v777 = vpack.c.b16 %v725, %v723
    %v778 = vpack.c.b16 %v726, %v724
    %v779 = vpack.c.b16 %v729, %v727
    %v780 = vpack.c.b16 %v730, %v728
    %v781 = vpack.c.b16 %v733, %v731
    %v782 = vpack.c.b16 %v734, %v732
    %v783 = vpack.c.b16 %v737, %v735
    %v784 = vpack.c.b16 %v738, %v736
    %v785 = vpack.c.b16 %v741, %v739
    %v786 = vpack.c.b16 %v742, %v740
    %v787 = vpack.c.b16 %v745, %v743
    %v788 = vpack.c.b16 %v746, %v744
    %v789 = vpack.c.b16 %v749, %v747
    %v790 = vpack.c.b16 %v750, %v748
    %v791 = vpack.c.b16 %v753, %v751
    %v792 = vpack.c.b16 %v754, %v752
    %v793 = vpack.c.b16 %v757, %v755
    %v794 = vpack.c.b16 %v758, %v756
    %v795 = vpack.c.b16 %v761, %v759
    %v796 = vpack.c.b16 %v762, %v760
    %v797 = vpack.c.b16 %v765, %v763
    %v798 = vpack.c.b16 %v766, %v764
    %831 = vmatprep.subr.bf16.mxu0 %v768
    %832 = vmatpush1.bf16.msra.mxu0 %v767
    %833 = vmatprep.subr.bf16.mxu0 %v770
    %834 = vmatpush1.bf16.msra.mxu0 %v769
    %835 = vmatprep.subr.bf16.mxu0 %v772
    %836 = vmatpush1.bf16.msra.mxu0 %v771
    %837 = vmatprep.subr.bf16.mxu0 %v774
    %838 = vmatpush1.bf16.msra.mxu0 %v773
    %839 = vmatprep.subr.bf16.mxu0 %v776
    %840 = vmatpush1.bf16.msra.mxu0 %v775
    %841 = vmatprep.subr.bf16.mxu0 %v778
    %842 = vmatpush1.bf16.msra.mxu0 %v777
    %843 = vmatprep.subr.bf16.mxu0 %v780
    %844 = vmatpush1.bf16.msra.mxu0 %v779
    %845 = vmatprep.subr.bf16.mxu0 %v782
    %846 = vmatpush1.bf16.msra.mxu0 %v781
    %847 = vmatprep.subr.bf16.mxu0 %v784
    %848 = vmatpush1.bf16.msra.mxu0 %v783
    %849 = vmatprep.subr.bf16.mxu0 %v786
    %850 = vmatpush1.bf16.msra.mxu0 %v785
    %851 = vmatprep.subr.bf16.mxu0 %v788
    %852 = vmatpush1.bf16.msra.mxu0 %v787
    %853 = vmatprep.subr.bf16.mxu0 %v790
    %854 = vmatpush1.bf16.msra.mxu0 %v789
    %855 = vmatprep.subr.bf16.mxu0 %v792
    %856 = vmatpush1.bf16.msra.mxu0 %v791
    %857 = vmatprep.subr.bf16.mxu0 %v794
    %858 = vmatpush1.bf16.msra.mxu0 %v793
    %859 = vmatprep.subr.bf16.mxu0 %v796
    %860 = vmatpush1.bf16.msra.mxu0 %v795
    %861 = vmatprep.subr.bf16.mxu0 %v798
    %862 = vmatpush1.bf16.msra.mxu0 %v797
    %863 = vmatprep.mubr.bf16.mxu0 %v637
    %864 = vmatmul.mubr.bf16.gmra.mrb[0].mxu0 %v636
    %v865 = vpop.f32.mrb[0].mxu0
    %v866 = vadd.f32 0.0, %v865
    %v867 = vpop.f32.mrb[0].mxu0
    %v868 = vadd.f32 0.0, %v867
    %v869 = vpop.f32.mrb[0].mxu0
    %v870 = vadd.f32 0.0, %v869
    %v871 = vpop.f32.mrb[0].mxu0
    %v872 = vadd.f32 0.0, %v871
    %873 = vdwg.mxu0
    %v874 = vpack.c.bf16 %v870, %v866
    %v875 = vpack.c.bf16 %v872, %v868
    %v878 = vunpack.c.l.s4 1966171168
    %v879 = vunpack.c.0.s8 %v878
    %v880 = vlaneseq
    %v881 = vshrl.u32 %v880, 7
    %v882 = vsub.s32 %v879, %v881
    %v883 = vrot.slane %v670, %v882
    %v884 = vcombine.high %v883, %v883
    %v886 = vunpack.c.l.s4 1966171168
    %v887 = vunpack.c.0.s8 %v886
    %v888 = vlaneseq
    %v889 = vshrl.u32 %v888, 7
    %v890 = vsub.s32 %v887, %v889
    %v891 = vrot.slane %v883, %v890
    %v893 = vunpack.c.l.s4 1966171168
    %v894 = vunpack.c.0.s8 %v893
    %v895 = vlaneseq
    %v896 = vshrl.u32 %v895, 7
    %v897 = vsub.s32 %v894, %v896
    %v898 = vrot.slane %v884, %v897
    %v900 = vpack.i.b16 %v891, %v891
    %v902 = vlaneseq
    %v903 = vshrl.u32 %v902, 7
    %v904 = vsub.s32 0, %v903
    %v905 = vrot.slane %v900, %v904
    %v907 = vpack.i.b16 %v898, %v898
    %v909 = vlaneseq
    %v910 = vshrl.u32 %v909, 7
    %v911 = vsub.s32 0, %v910
    %v912 = vrot.slane %v907, %v911
    %v913 = vadd.bf16 %v874, %v905
    %v914 = vadd.bf16 %v875, %v912
    %v917 = vunpack.c.l.b16 %v913
    %v918 = vunpack.c.l.b16 %v914
    %v919 = vunpack.c.h.b16 %v913
    %v920 = vunpack.c.h.b16 %v914
    %v921 = vpack.c.b16 %v918, %v917
    %v922 = vpack.c.b16 %v920, %v919
    %925 = vst [vmem:[%s7] sm:$0xff] %v921
    %926 = vst [vmem:[%s7 + $0x8] sm:$0xff] %v922
    // Predicated region
    $region42: #{fwd.1} parent=1 // pred_check
      _
    $region43: #{fwd.1} parent=1 // pred_check_branch
      %928 = sbr.rel (0) target = $region45
    $region44: #{fwd.1} parent=1 // pred_region
      _
    $region45: #{fwd.1} parent=1 // pred_fallthru
      _
    // Predicated region
    $region46: #{fwd.1} parent=1 // pred_check
      _
    $region47: #{fwd.1} parent=1 // pred_check_branch
      %930 = sbr.rel (0) target = $region49
    $region48: #{fwd.1} parent=1 // pred_region
      _
    $region49: #{fwd.1} parent=1 // pred_fallthru
      _
    %931 = vsyncpa [#allocation3], 1
    %932 = vsyncpa [#allocation5], 1

// kernel: fwd.1
$region0: #{fwd.1}
  #allocation0 [shape = 'u32[]', space=smem, size = 0x4, offset = 0x4, fixed_abs, tag = 'smem constant byte address 0x4 - core index']
  #allocation1 [shape = 'u32[144,128]{1,0:T(1,128)}', space=vmem, size = 0x12000, scoped, tag = 'internal scratch']
  %s0 = inlined_call_operand.vmem [shape: bf16[16,256], index: 0, kind: input, shape index: {}]
  %s1 = inlined_call_operand.hbm [shape: bf16[256,256], index: 1, kind: input, shape index: {}]
  %s2 = inlined_call_operand.vmem [shape: bf16[1,256], index: 2, kind: input, shape index: {}]
  %s3 = inlined_call_operand.hbm [shape: bf16[256,256], index: 3, kind: input, shape index: {}]
  %s4 = inlined_call_operand.vmem [shape: bf16[1,256], index: 4, kind: input, shape index: {}]
  %s5 = inlined_call_operand.hbm [shape: bf16[256,256], index: 5, kind: input, shape index: {}]
  %s6 = inlined_call_operand.vmem [shape: bf16[1,256], index: 6, kind: input, shape index: {}]
  %s7 = inlined_call_operand.vmem [shape: bf16[16,256], index: 7, kind: output, shape index: {}]
  %s8 = sld [smem:[#allocation0]]
  $region50: #{fwd.1} parent=0
    _
  %s10 = ssub.s32 1, %s8
  %s11 = scalar_select 0, %s10, %s8
  $region1: #{fwd.1} parent=0
    #allocation2 [shape = 'u8[131072]{0}', space=vmem, size = 0x20000, scoped, tag = 'input window, operand 1, single buffered']
    #allocation3 [shape = 's32[1]{0}', space=sflag, size = 0x4, scoped, tag = 'scoped memory for fwd.1']
    #allocation4 [shape = 'u8[131072]{0}', space=vmem, size = 0x20000, scoped, tag = 'input window, operand 3, single buffered']
    #allocation5 [shape = 's32[1]{0}', space=sflag, size = 0x4, scoped, tag = 'scoped memory for fwd.1']
    #allocation6 [shape = 'u8[131072]{0}', space=vmem, size = 0x20000, scoped, tag = 'input window, operand 5, single buffered']
    %12 = vsyncpa [#allocation3], 0
    %13 = vsyncpa [#allocation5], 0
    // Predicated region
    $region2: #{fwd.1} parent=1 // pred_check
      _
    $region3: #{fwd.1} parent=1 // pred_check_branch
      %15 = sbr.rel (0) target = $region5
    $region4: #{fwd.1} parent=1 // pred_region
      _
    $region5: #{fwd.1} parent=1 // pred_fallthru
      _
    // Predicated region
    $region6: #{fwd.1} parent=1 // pred_check
      _
    $region7: #{fwd.1} parent=1 // pred_check_branch
      %17 = sbr.rel (0) target = $region9
    $region8: #{fwd.1} parent=1 // pred_region
      %s19 = ssub.s32 4096, 4096
      %20 = vsyncadd [#allocation3], %s19
      %s21 = sshll.u32 [#allocation2], 4
      %s22 = int_to_ptr.vmem [resolvable:$true] %s21
      %27 = dma.hbm_to_vmem [thread:$0]  %s1, 4096, %s22, [#allocation3], 128, 128, 8
    $region9: #{fwd.1} parent=1 // pred_fallthru
      _
    // Predicated region
    $region10: #{fwd.1} parent=1 // pred_check
      _
    $region11: #{fwd.1} parent=1 // pred_check_branch
      %29 = sbr.rel (0) target = $region13
    $region12: #{fwd.1} parent=1 // pred_region
      _
    $region13: #{fwd.1} parent=1 // pred_fallthru
      _
    // Predicated region
    $region14: #{fwd.1} parent=1 // pred_check
      _
    $region15: #{fwd.1} parent=1 // pred_check_branch
      %31 = sbr.rel (0) target = $region17
    $region16: #{fwd.1} parent=1 // pred_region
      %s33 = ssub.s32 4096, 4096
      %34 = vsyncadd [#allocation5], %s33
      %s35 = sshll.u32 [#allocation4], 4
      %s36 = int_to_ptr.vmem [resolvable:$true] %s35
      %41 = dma.hbm_to_vmem [thread:$0]  %s3, 4096, %s36, [#allocation5], 128, 128, 8
    $region17: #{fwd.1} parent=1 // pred_fallthru
      _
    // Predicated region
    $region18: #{fwd.1} parent=1 // pred_check
      _
    $region19: #{fwd.1} parent=1 // pred_check_branch
      %43 = sbr.rel (0) target = $region21
    $region20: #{fwd.1} parent=1 // pred_region
      _
    $region21: #{fwd.1} parent=1 // pred_fallthru
      _
    // Predicated region
    $region22: #{fwd.1} parent=1 // pred_check
      _
    $region23: #{fwd.1} parent=1 // pred_check_branch
      %45 = sbr.rel (0) target = $region25
    $region24: #{fwd.1} parent=1 // pred_region
      %s47 = ssub.s32 4096, 4096
      %48 = vsyncadd [#allocation5], %s47
      %s49 = sshll.u32 [#allocation6], 4
      %s50 = int_to_ptr.vmem [resolvable:$true] %s49
      %55 = dma.hbm_to_vmem [thread:$0]  %s5, 4096, %s50, [#allocation5], 128, 128, 8
    $region25: #{fwd.1} parent=1 // pred_fallthru
      _
    // Predicated region
    $region26: #{fwd.1} parent=1 // pred_check
      _
    $region27: #{fwd.1} parent=1 // pred_check_branch
      %57 = sbr.rel (0) target = $region29
    $region28: #{fwd.1} parent=1 // pred_region
      _
    $region29: #{fwd.1} parent=1 // pred_fallthru
      _
    // Predicated region
    $region30: #{fwd.1} parent=1 // pred_check
      _
    $region31: #{fwd.1} parent=1 // pred_check_branch
      %59 = sbr.rel (0) target = $region33
    $region32: #{fwd.1} parent=1 // pred_region
      %60 = dma.done [#allocation3], 4096
    $region33: #{fwd.1} parent=1 // pred_fallthru
      _
    // Predicated region
    $region34: #{fwd.1} parent=1 // pred_check
      _
    $region35: #{fwd.1} parent=1 // pred_check_branch
      %62 = sbr.rel (0) target = $region37
    $region36: #{fwd.1} parent=1 // pred_region
      %63 = dma.done [#allocation5], 4096
    $region37: #{fwd.1} parent=1 // pred_fallthru
      _
    // Predicated region
    $region38: #{fwd.1} parent=1 // pred_check
      _
    $region39: #{fwd.1} parent=1 // pred_check_branch
      %65 = sbr.rel (0) target = $region41
    $region40: #{fwd.1} parent=1 // pred_region
      %66 = dma.done [#allocation5], 4096
    $region41: #{fwd.1} parent=1 // pred_fallthru
      _
    %v68 = vld [vmem:[%s0] sm:$0xff]
    %v69 = vld [vmem:[%s0 + $0x8] sm:$0xff]
    %v70 = vld [vmem:[#allocation2] sm:$0xff]
    %v71 = vld [vmem:[#allocation2 + $0x8] sm:$0xff]
    %v72 = vld [vmem:[#allocation2 + $0x10] sm:$0xff]
    %v73 = vld [vmem:[#allocation2 + $0x18] sm:$0xff]
    %v74 = vld [vmem:[#allocation2 + $0x20] sm:$0xff]
    %v75 = vld [vmem:[#allocation2 + $0x28] sm:$0xff]
    %v76 = vld [vmem:[#allocation2 + $0x30] sm:$0xff]
    %v77 = vld [vmem:[#allocation2 + $0x38] sm:$0xff]
    %v78 = vld [vmem:[#allocation2 + $0x40] sm:$0xff]
    %v79 = vld [vmem:[#allocation2 + $0x48] sm:$0xff]
    %v80 = vld [vmem:[#allocation2 + $0x50] sm:$0xff]
    %v81 = vld [vmem:[#allocation2 + $0x58] sm:$0xff]
    %v82 = vld [vmem:[#allocation2 + $0x60] sm:$0xff]
    %v83 = vld [vmem:[#allocation2 + $0x68] sm:$0xff]
    %v84 = vld [vmem:[#allocation2 + $0x70] sm:$0xff]
    %v85 = vld [vmem:[#allocation2 + $0x78] sm:$0xff]
    %v86 = vld [vmem:[#allocation2 + $0x80] sm:$0xff]
    %v87 = vld [vmem:[#allocation2 + $0x88] sm:$0xff]
    %v88 = vld [vmem:[#allocation2 + $0x90] sm:$0xff]
    %v89 = vld [vmem:[#allocation2 + $0x98] sm:$0xff]
    %v90 = vld [vmem:[#allocation2 + $0xa0] sm:$0xff]
    %v91 = vld [vmem:[#allocation2 + $0xa8] sm:$0xff]
    %v92 = vld [vmem:[#allocation2 + $0xb0] sm:$0xff]
    %v93 = vld [vmem:[#allocation2 + $0xb8] sm:$0xff]
    %v94 = vld [vmem:[#allocation2 + $0xc0] sm:$0xff]
    %v95 = vld [vmem:[#allocation2 + $0xc8] sm:$0xff]
    %v96 = vld [vmem:[#allocation2 + $0xd0] sm:$0xff]
    %v97 = vld [vmem:[#allocation2 + $0xd8] sm:$0xff]
    %v98 = vld [vmem:[#allocation2 + $0xe0] sm:$0xff]
    %v99 = vld [vmem:[#allocation2 + $0xe8] sm:$0xff]
    %v100 = vld [vmem:[#allocation2 + $0xf0] sm:$0xff]
    %v101 = vld [vmem:[#allocation2 + $0xf8] sm:$0xff]
    %v102 = vld [vmem:[%s2] sm:$0x3]
    %v105 = vunpack.c.l.b16 %v68
    %v106 = vunpack.c.h.b16 %v68
    %v107 = vunpack.c.l.b16 %v69
    %v108 = vunpack.c.h.b16 %v69
    %v109 = vpack.c.b16 %v107, %v105
    %v110 = vpack.c.b16 %v108, %v106
    %v145 = vunpack.c.l.b16 %v70
    %v146 = vunpack.c.h.b16 %v70
    %v147 = vunpack.c.l.b16 %v71
    %v148 = vunpack.c.h.b16 %v71
    %v149 = vunpack.c.l.b16 %v72
    %v150 = vunpack.c.h.b16 %v72
    %v151 = vunpack.c.l.b16 %v73
    %v152 = vunpack.c.h.b16 %v73
    %v153 = vunpack.c.l.b16 %v74
    %v154 = vunpack.c.h.b16 %v74
    %v155 = vunpack.c.l.b16 %v75
    %v156 = vunpack.c.h.b16 %v75
    %v157 = vunpack.c.l.b16 %v76
    %v158 = vunpack.c.h.b16 %v76
    %v159 = vunpack.c.l.b16 %v77
    %v160 = vunpack.c.h.b16 %v77
    %v161 = vunpack.c.l.b16 %v78
    %v162 = vunpack.c.h.b16 %v78
    %v163 = vunpack.c.l.b16 %v79
    %v164 = vunpack.c.h.b16 %v79
    %v165 = vunpack.c.l.b16 %v80
    %v166 = vunpack.c.h.b16 %v80
    %v167 = vunpack.c.l.b16 %v81
    %v168 = vunpack.c.h.b16 %v81
    %v169 = vunpack.c.l.b16 %v82
    %v170 = vunpack.c.h.b16 %v82
    %v171 = vunpack.c.l.b16 %v83
    %v172 = vunpack.c.h.b16 %v83
    %v173 = vunpack.c.l.b16 %v84
    %v174 = vunpack.c.h.b16 %v84
    %v175 = vunpack.c.l.b16 %v85
    %v176 = vunpack.c.h.b16 %v85
    %v177 = vunpack.c.l.b16 %v86
    %v178 = vunpack.c.h.b16 %v86
    %v179 = vunpack.c.l.b16 %v87
    %v180 = vunpack.c.h.b16 %v87
    %v181 = vunpack.c.l.b16 %v88
    %v182 = vunpack.c.h.b16 %v88
    %v183 = vunpack.c.l.b16 %v89
    %v184 = vunpack.c.h.b16 %v89
    %v185 = vunpack.c.l.b16 %v90
    %v186 = vunpack.c.h.b16 %v90
    %v187 = vunpack.c.l.b16 %v91
    %v188 = vunpack.c.h.b16 %v91
    %v189 = vunpack.c.l.b16 %v92
    %v190 = vunpack.c.h.b16 %v92
    %v191 = vunpack.c.l.b16 %v93
    %v192 = vunpack.c.h.b16 %v93
    %v193 = vunpack.c.l.b16 %v94
    %v194 = vunpack.c.h.b16 %v94
    %v195 = vunpack.c.l.b16 %v95
    %v196 = vunpack.c.h.b16 %v95
    %v197 = vunpack.c.l.b16 %v96
    %v198 = vunpack.c.h.b16 %v96
    %v199 = vunpack.c.l.b16 %v97
    %v200 = vunpack.c.h.b16 %v97
    %v201 = vunpack.c.l.b16 %v98
    %v202 = vunpack.c.h.b16 %v98
    %v203 = vunpack.c.l.b16 %v99
    %v204 = vunpack.c.h.b16 %v99
    %v205 = vunpack.c.l.b16 %v100
    %v206 = vunpack.c.h.b16 %v100
    %v207 = vunpack.c.l.b16 %v101
    %v208 = vunpack.c.h.b16 %v101
    %v209 = vpack.c.b16 %v147, %v145
    %v210 = vpack.c.b16 %v148, %v146
    %v211 = vpack.c.b16 %v151, %v149
    %v212 = vpack.c.b16 %v152, %v150
    %v213 = vpack.c.b16 %v155, %v153
    %v214 = vpack.c.b16 %v156, %v154
    %v215 = vpack.c.b16 %v159, %v157
    %v216 = vpack.c.b16 %v160, %v158
    %v217 = vpack.c.b16 %v163, %v161
    %v218 = vpack.c.b16 %v164, %v162
    %v219 = vpack.c.b16 %v167, %v165
    %v220 = vpack.c.b16 %v168, %v166
    %v221 = vpack.c.b16 %v171, %v169
    %v222 = vpack.c.b16 %v172, %v170
    %v223 = vpack.c.b16 %v175, %v173
    %v224 = vpack.c.b16 %v176, %v174
    %v225 = vpack.c.b16 %v179, %v177
    %v226 = vpack.c.b16 %v180, %v178
    %v227 = vpack.c.b16 %v183, %v181
    %v228 = vpack.c.b16 %v184, %v182
    %v229 = vpack.c.b16 %v187, %v185
    %v230 = vpack.c.b16 %v188, %v186
    %v231 = vpack.c.b16 %v191, %v189
    %v232 = vpack.c.b16 %v192, %v190
    %v233 = vpack.c.b16 %v195, %v193
    %v234 = vpack.c.b16 %v196, %v194
    %v235 = vpack.c.b16 %v199, %v197
    %v236 = vpack.c.b16 %v200, %v198
    %v237 = vpack.c.b16 %v203, %v201
    %v238 = vpack.c.b16 %v204, %v202
    %v239 = vpack.c.b16 %v207, %v205
    %v240 = vpack.c.b16 %v208, %v206
    %273 = vmatprep.subr.bf16.mxu0 %v210
    %274 = vmatpush1.bf16.msra.mxu0 %v209
    %275 = vmatprep.subr.bf16.mxu0 %v212
    %276 = vmatpush1.bf16.msra.mxu0 %v211
    %277 = vmatprep.subr.bf16.mxu0 %v214
    %278 = vmatpush1.bf16.msra.mxu0 %v213
    %279 = vmatprep.subr.bf16.mxu0 %v216
    %280 = vmatpush1.bf16.msra.mxu0 %v215
    %281 = vmatprep.subr.bf16.mxu0 %v218
    %282 = vmatpush1.bf16.msra.mxu0 %v217
    %283 = vmatprep.subr.bf16.mxu0 %v220
    %284 = vmatpush1.bf16.msra.mxu0 %v219
    %285 = vmatprep.subr.bf16.mxu0 %v222
    %286 = vmatpush1.bf16.msra.mxu0 %v221
    %287 = vmatprep.subr.bf16.mxu0 %v224
    %288 = vmatpush1.bf16.msra.mxu0 %v223
    %289 = vmatprep.subr.bf16.mxu0 %v226
    %290 = vmatpush1.bf16.msra.mxu0 %v225
    %291 = vmatprep.subr.bf16.mxu0 %v228
    %292 = vmatpush1.bf16.msra.mxu0 %v227
    %293 = vmatprep.subr.bf16.mxu0 %v230
    %294 = vmatpush1.bf16.msra.mxu0 %v229
    %295 = vmatprep.subr.bf16.mxu0 %v232
    %296 = vmatpush1.bf16.msra.mxu0 %v231
    %297 = vmatprep.subr.bf16.mxu0 %v234
    %298 = vmatpush1.bf16.msra.mxu0 %v233
    %299 = vmatprep.subr.bf16.mxu0 %v236
    %300 = vmatpush1.bf16.msra.mxu0 %v235
    %301 = vmatprep.subr.bf16.mxu0 %v238
    %302 = vmatpush1.bf16.msra.mxu0 %v237
    %303 = vmatprep.subr.bf16.mxu0 %v240
    %304 = vmatpush1.bf16.msra.mxu0 %v239
    %305 = vmatprep.mubr.bf16.mxu0 %v110
    %306 = vmatmul.mubr.bf16.gmra.mrb[0].mxu0 %v109
    %v307 = vpop.f32.mrb[0].mxu0
    %v308 = vadd.f32 0.0, %v307
    %v309 = vpop.f32.mrb[0].mxu0
    %v310 = vadd.f32 0.0, %v309
    %v311 = vpop.f32.mrb[0].mxu0
    %v312 = vadd.f32 0.0, %v311
    %v313 = vpop.f32.mrb[0].mxu0
    %v314 = vadd.f32 0.0, %v313
    %315 = vdwg.mxu0
    %v316 = vpack.c.bf16 %v312, %v308
    %v317 = vpack.c.bf16 %v314, %v310
    %v320 = vunpack.c.l.s4 1966171168
    %v321 = vunpack.c.0.s8 %v320
    %v322 = vlaneseq
    %v323 = vshrl.u32 %v322, 7
    %v324 = vsub.s32 %v321, %v323
    %v325 = vrot.slane %v102, %v324
    %v326 = vcombine.high %v325, %v325
    %v328 = vunpack.c.l.s4 1966171168
    %v329 = vunpack.c.0.s8 %v328
    %v330 = vlaneseq
    %v331 = vshrl.u32 %v330, 7
    %v332 = vsub.s32 %v329, %v331
    %v333 = vrot.slane %v325, %v332
    %v335 = vunpack.c.l.s4 1966171168
    %v336 = vunpack.c.0.s8 %v335
    %v337 = vlaneseq
    %v338 = vshrl.u32 %v337, 7
    %v339 = vsub.s32 %v336, %v338
    %v340 = vrot.slane %v326, %v339
    %v342 = vpack.i.b16 %v333, %v333
    %v344 = vlaneseq
    %v345 = vshrl.u32 %v344, 7
    %v346 = vsub.s32 0, %v345
    %v347 = vrot.slane %v342, %v346
    %v349 = vpack.i.b16 %v340, %v340
    %v351 = vlaneseq
    %v352 = vshrl.u32 %v351, 7
    %v353 = vsub.s32 0, %v352
    %v354 = vrot.slane %v349, %v353
    %v355 = vadd.bf16 %v316, %v347
    %v356 = vadd.bf16 %v317, %v354
    %v357 = vmax.bf16 %v355, 0
    %v358 = vmax.bf16 %v356, 0
    %v359 = vld [vmem:[#allocation4] sm:$0xff]
    %v360 = vld [vmem:[#allocation4 + $0x8] sm:$0xff]
    %v361 = vld [vmem:[#allocation4 + $0x10] sm:$0xff]
    %v362 = vld [vmem:[#allocation4 + $0x18] sm:$0xff]
    %v363 = vld [vmem:[#allocation4 + $0x20] sm:$0xff]
    %v364 = vld [vmem:[#allocation4 + $0x28] sm:$0xff]
    %v365 = vld [vmem:[#allocation4 + $0x30] sm:$0xff]
    %v366 = vld [vmem:[#allocation4 + $0x38] sm:$0xff]
    %v367 = vld [vmem:[#allocation4 + $0x40] sm:$0xff]
    %v368 = vld [vmem:[#allocation4 + $0x48] sm:$0xff]
    %v369 = vld [vmem:[#allocation4 + $0x50] sm:$0xff]
    %v370 = vld [vmem:[#allocation4 + $0x58] sm:$0xff]
    %v371 = vld [vmem:[#allocation4 + $0x60] sm:$0xff]
    %v372 = vld [vmem:[#allocation4 + $0x68] sm:$0xff]
    %v373 = vld [vmem:[#allocation4 + $0x70] sm:$0xff]
    %v374 = vld [vmem:[#allocation4 + $0x78] sm:$0xff]
    %v375 = vld [vmem:[#allocation4 + $0x80] sm:$0xff]
    %v376 = vld [vmem:[#allocation4 + $0x88] sm:$0xff]
    %v377 = vld [vmem:[#allocation4 + $0x90] sm:$0xff]
    %v378 = vld [vmem:[#allocation4 + $0x98] sm:$0xff]
    %v379 = vld [vmem:[#allocation4 + $0xa0] sm:$0xff]
    %v380 = vld [vmem:[#allocation4 + $0xa8] sm:$0xff]
    %v381 = vld [vmem:[#allocation4 + $0xb0] sm:$0xff]
    %v382 = vld [vmem:[#allocation4 + $0xb8] sm:$0xff]
    %v383 = vld [vmem:[#allocation4 + $0xc0] sm:$0xff]
    %v384 = vld [vmem:[#allocation4 + $0xc8] sm:$0xff]
    %v385 = vld [vmem:[#allocation4 + $0xd0] sm:$0xff]
    %v386 = vld [vmem:[#allocation4 + $0xd8] sm:$0xff]
    %v387 = vld [vmem:[#allocation4 + $0xe0] sm:$0xff]
    %v388 = vld [vmem:[#allocation4 + $0xe8] sm:$0xff]
    %v389 = vld [vmem:[#allocation4 + $0xf0] sm:$0xff]
    %v390 = vld [vmem:[#allocation4 + $0xf8] sm:$0xff]
    %v391 = vld [vmem:[%s4] sm:$0x3]
    %v424 = vunpack.c.l.b16 %v359
    %v425 = vunpack.c.h.b16 %v359
    %v426 = vunpack.c.l.b16 %v360
    %v427 = vunpack.c.h.b16 %v360
    %v428 = vunpack.c.l.b16 %v361
    %v429 = vunpack.c.h.b16 %v361
    %v430 = vunpack.c.l.b16 %v362
    %v431 = vunpack.c.h.b16 %v362
    %v432 = vunpack.c.l.b16 %v363
    %v433 = vunpack.c.h.b16 %v363
    %v434 = vunpack.c.l.b16 %v364
    %v435 = vunpack.c.h.b16 %v364
    %v436 = vunpack.c.l.b16 %v365
    %v437 = vunpack.c.h.b16 %v365
    %v438 = vunpack.c.l.b16 %v366
    %v439 = vunpack.c.h.b16 %v366
    %v440 = vunpack.c.l.b16 %v367
    %v441 = vunpack.c.h.b16 %v367
    %v442 = vunpack.c.l.b16 %v368
    %v443 = vunpack.c.h.b16 %v368
    %v444 = vunpack.c.l.b16 %v369
    %v445 = vunpack.c.h.b16 %v369
    %v446 = vunpack.c.l.b16 %v370
    %v447 = vunpack.c.h.b16 %v370
    %v448 = vunpack.c.l.b16 %v371
    %v449 = vunpack.c.h.b16 %v371
    %v450 = vunpack.c.l.b16 %v372
    %v451 = vunpack.c.h.b16 %v372
    %v452 = vunpack.c.l.b16 %v373
    %v453 = vunpack.c.h.b16 %v373
    %v454 = vunpack.c.l.b16 %v374
    %v455 = vunpack.c.h.b16 %v374
    %v456 = vunpack.c.l.b16 %v375
    %v457 = vunpack.c.h.b16 %v375
    %v458 = vunpack.c.l.b16 %v376
    %v459 = vunpack.c.h.b16 %v376
    %v460 = vunpack.c.l.b16 %v377
    %v461 = vunpack.c.h.b16 %v377
    %v462 = vunpack.c.l.b16 %v378
    %v463 = vunpack.c.h.b16 %v378
    %v464 = vunpack.c.l.b16 %v379
    %v465 = vunpack.c.h.b16 %v379
    %v466 = vunpack.c.l.b16 %v380
    %v467 = vunpack.c.h.b16 %v380
    %v468 = vunpack.c.l.b16 %v381
    %v469 = vunpack.c.h.b16 %v381
    %v470 = vunpack.c.l.b16 %v382
    %v471 = vunpack.c.h.b16 %v382
    %v472 = vunpack.c.l.b16 %v383
    %v473 = vunpack.c.h.b16 %v383
    %v474 = vunpack.c.l.b16 %v384
    %v475 = vunpack.c.h.b16 %v384
    %v476 = vunpack.c.l.b16 %v385
    %v477 = vunpack.c.h.b16 %v385
    %v478 = vunpack.c.l.b16 %v386
    %v479 = vunpack.c.h.b16 %v386
    %v480 = vunpack.c.l.b16 %v387
    %v481 = vunpack.c.h.b16 %v387
    %v482 = vunpack.c.l.b16 %v388
    %v483 = vunpack.c.h.b16 %v388
    %v484 = vunpack.c.l.b16 %v389
    %v485 = vunpack.c.h.b16 %v389
    %v486 = vunpack.c.l.b16 %v390
    %v487 = vunpack.c.h.b16 %v390
    %v488 = vpack.c.b16 %v426, %v424
    %v489 = vpack.c.b16 %v427, %v425
    %v490 = vpack.c.b16 %v430, %v428
    %v491 = vpack.c.b16 %v431, %v429
    %v492 = vpack.c.b16 %v434, %v432
    %v493 = vpack.c.b16 %v435, %v433
    %v494 = vpack.c.b16 %v438, %v436
    %v495 = vpack.c.b16 %v439, %v437
    %v496 = vpack.c.b16 %v442, %v440
    %v497 = vpack.c.b16 %v443, %v441
    %v498 = vpack.c.b16 %v446, %v444
    %v499 = vpack.c.b16 %v447, %v445
    %v500 = vpack.c.b16 %v450, %v448
    %v501 = vpack.c.b16 %v451, %v449
    %v502 = vpack.c.b16 %v454, %v452
    %v503 = vpack.c.b16 %v455, %v453
    %v504 = vpack.c.b16 %v458, %v456
    %v505 = vpack.c.b16 %v459, %v457
    %v506 = vpack.c.b16 %v462, %v460
    %v507 = vpack.c.b16 %v463, %v461
    %v508 = vpack.c.b16 %v466, %v464
    %v509 = vpack.c.b16 %v467, %v465
    %v510 = vpack.c.b16 %v470, %v468
    %v511 = vpack.c.b16 %v471, %v469
    %v512 = vpack.c.b16 %v474, %v472
    %v513 = vpack.c.b16 %v475, %v473
    %v514 = vpack.c.b16 %v478, %v476
    %v515 = vpack.c.b16 %v479, %v477
    %v516 = vpack.c.b16 %v482, %v480
    %v517 = vpack.c.b16 %v483, %v481
    %v518 = vpack.c.b16 %v486, %v484
    %v519 = vpack.c.b16 %v487, %v485
    %552 = vmatprep.subr.bf16.mxu0 %v489
    %553 = vmatpush1.bf16.msra.mxu0 %v488
    %554 = vmatprep.subr.bf16.mxu0 %v491
    %555 = vmatpush1.bf16.msra.mxu0 %v490
    %556 = vmatprep.subr.bf16.mxu0 %v493
    %557 = vmatpush1.bf16.msra.mxu0 %v492
    %558 = vmatprep.subr.bf16.mxu0 %v495
    %559 = vmatpush1.bf16.msra.mxu0 %v494
    %560 = vmatprep.subr.bf16.mxu0 %v497
    %561 = vmatpush1.bf16.msra.mxu0 %v496
    %562 = vmatprep.subr.bf16.mxu0 %v499
    %563 = vmatpush1.bf16.msra.mxu0 %v498
    %564 = vmatprep.subr.bf16.mxu0 %v501
    %565 = vmatpush1.bf16.msra.mxu0 %v500
    %566 = vmatprep.subr.bf16.mxu0 %v503
    %567 = vmatpush1.bf16.msra.mxu0 %v502
    %568 = vmatprep.subr.bf16.mxu0 %v505
    %569 = vmatpush1.bf16.msra.mxu0 %v504
    %570 = vmatprep.subr.bf16.mxu0 %v507
    %571 = vmatpush1.bf16.msra.mxu0 %v506
    %572 = vmatprep.subr.bf16.mxu0 %v509
    %573 = vmatpush1.bf16.msra.mxu0 %v508
    %574 = vmatprep.subr.bf16.mxu0 %v511
    %575 = vmatpush1.bf16.msra.mxu0 %v510
    %576 = vmatprep.subr.bf16.mxu0 %v513
    %577 = vmatpush1.bf16.msra.mxu0 %v512
    %578 = vmatprep.subr.bf16.mxu0 %v515
    %579 = vmatpush1.bf16.msra.mxu0 %v514
    %580 = vmatprep.subr.bf16.mxu0 %v517
    %581 = vmatpush1.bf16.msra.mxu0 %v516
    %582 = vmatprep.subr.bf16.mxu0 %v519
    %583 = vmatpush1.bf16.msra.mxu0 %v518
    %584 = vmatprep.mubr.bf16.mxu0 %v358
    %585 = vmatmul.mubr.bf16.gmra.mrb[0].mxu0 %v357
    %v586 = vpop.f32.mrb[0].mxu0
    %v587 = vadd.f32 0.0, %v586
    %v588 = vpop.f32.mrb[0].mxu0
    %v589 = vadd.f32 0.0, %v588
    %v590 = vpop.f32.mrb[0].mxu0
    %v591 = vadd.f32 0.0, %v590
    %v592 = vpop.f32.mrb[0].mxu0
    %v593 = vadd.f32 0.0, %v592
    %594 = vdwg.mxu0
    %v595 = vpack.c.bf16 %v591, %v587
    %v596 = vpack.c.bf16 %v593, %v589
    %v599 = vunpack.c.l.s4 1966171168
    %v600 = vunpack.c.0.s8 %v599
    %v601 = vlaneseq
    %v602 = vshrl.u32 %v601, 7
    %v603 = vsub.s32 %v600, %v602
    %v604 = vrot.slane %v391, %v603
    %v605 = vcombine.high %v604, %v604
    %v607 = vunpack.c.l.s4 1966171168
    %v608 = vunpack.c.0.s8 %v607
    %v609 = vlaneseq
    %v610 = vshrl.u32 %v609, 7
    %v611 = vsub.s32 %v608, %v610
    %v612 = vrot.slane %v604, %v611
    %v614 = vunpack.c.l.s4 1966171168
    %v615 = vunpack.c.0.s8 %v614
    %v616 = vlaneseq
    %v617 = vshrl.u32 %v616, 7
    %v618 = vsub.s32 %v615, %v617
    %v619 = vrot.slane %v605, %v618
    %v621 = vpack.i.b16 %v612, %v612
    %v623 = vlaneseq
    %v624 = vshrl.u32 %v623, 7
    %v625 = vsub.s32 0, %v624
    %v626 = vrot.slane %v621, %v625
    %v628 = vpack.i.b16 %v619, %v619
    %v630 = vlaneseq
    %v631 = vshrl.u32 %v630, 7
    %v632 = vsub.s32 0, %v631
    %v633 = vrot.slane %v628, %v632
    %v634 = vadd.bf16 %v595, %v626
    %v635 = vadd.bf16 %v596, %v633
    %v636 = vmax.bf16 %v634, 0
    %v637 = vmax.bf16 %v635, 0
    %v638 = vld [vmem:[#allocation6] sm:$0xff]
    %v639 = vld [vmem:[#allocation6 + $0x8] sm:$0xff]
    %v640 = vld [vmem:[#allocation6 + $0x10] sm:$0xff]
    %v641 = vld [vmem:[#allocation6 + $0x18] sm:$0xff]
    %v642 = vld [vmem:[#allocation6 + $0x20] sm:$0xff]
    %v643 = vld [vmem:[#allocation6 + $0x28] sm:$0xff]
    %v644 = vld [vmem:[#allocation6 + $0x30] sm:$0xff]
    %v645 = vld [vmem:[#allocation6 + $0x38] sm:$0xff]
    %v646 = vld [vmem:[#allocation6 + $0x40] sm:$0xff]
    %v647 = vld [vmem:[#allocation6 + $0x48] sm:$0xff]
    %v648 = vld [vmem:[#allocation6 + $0x50] sm:$0xff]
    %v649 = vld [vmem:[#allocation6 + $0x58] sm:$0xff]
    %v650 = vld [vmem:[#allocation6 + $0x60] sm:$0xff]
    %v651 = vld [vmem:[#allocation6 + $0x68] sm:$0xff]
    %v652 = vld [vmem:[#allocation6 + $0x70] sm:$0xff]
    %v653 = vld [vmem:[#allocation6 + $0x78] sm:$0xff]
    %v654 = vld [vmem:[#allocation6 + $0x80] sm:$0xff]
    %v655 = vld [vmem:[#allocation6 + $0x88] sm:$0xff]
    %v656 = vld [vmem:[#allocation6 + $0x90] sm:$0xff]
    %v657 = vld [vmem:[#allocation6 + $0x98] sm:$0xff]
    %v658 = vld [vmem:[#allocation6 + $0xa0] sm:$0xff]
    %v659 = vld [vmem:[#allocation6 + $0xa8] sm:$0xff]
    %v660 = vld [vmem:[#allocation6 + $0xb0] sm:$0xff]
    %v661 = vld [vmem:[#allocation6 + $0xb8] sm:$0xff]
    %v662 = vld [vmem:[#allocation6 + $0xc0] sm:$0xff]
    %v663 = vld [vmem:[#allocation6 + $0xc8] sm:$0xff]
    %v664 = vld [vmem:[#allocation6 + $0xd0] sm:$0xff]
    %v665 = vld [vmem:[#allocation6 + $0xd8] sm:$0xff]
    %v666 = vld [vmem:[#allocation6 + $0xe0] sm:$0xff]
    %v667 = vld [vmem:[#allocation6 + $0xe8] sm:$0xff]
    %v668 = vld [vmem:[#allocation6 + $0xf0] sm:$0xff]
    %v669 = vld [vmem:[#allocation6 + $0xf8] sm:$0xff]
    %v670 = vld [vmem:[%s6] sm:$0x3]
    %v703 = vunpack.c.l.b16 %v638
    %v704 = vunpack.c.h.b16 %v638
    %v705 = vunpack.c.l.b16 %v639
    %v706 = vunpack.c.h.b16 %v639
    %v707 = vunpack.c.l.b16 %v640
    %v708 = vunpack.c.h.b16 %v640
    %v709 = vunpack.c.l.b16 %v641
    %v710 = vunpack.c.h.b16 %v641
    %v711 = vunpack.c.l.b16 %v642
    %v712 = vunpack.c.h.b16 %v642
    %v713 = vunpack.c.l.b16 %v643
    %v714 = vunpack.c.h.b16 %v643
    %v715 = vunpack.c.l.b16 %v644
    %v716 = vunpack.c.h.b16 %v644
    %v717 = vunpack.c.l.b16 %v645
    %v718 = vunpack.c.h.b16 %v645
    %v719 = vunpack.c.l.b16 %v646
    %v720 = vunpack.c.h.b16 %v646
    %v721 = vunpack.c.l.b16 %v647
    %v722 = vunpack.c.h.b16 %v647
    %v723 = vunpack.c.l.b16 %v648
    %v724 = vunpack.c.h.b16 %v648
    %v725 = vunpack.c.l.b16 %v649
    %v726 = vunpack.c.h.b16 %v649
    %v727 = vunpack.c.l.b16 %v650
    %v728 = vunpack.c.h.b16 %v650
    %v729 = vunpack.c.l.b16 %v651
    %v730 = vunpack.c.h.b16 %v651
    %v731 = vunpack.c.l.b16 %v652
    %v732 = vunpack.c.h.b16 %v652
    %v733 = vunpack.c.l.b16 %v653
    %v734 = vunpack.c.h.b16 %v653
    %v735 = vunpack.c.l.b16 %v654
    %v736 = vunpack.c.h.b16 %v654
    %v737 = vunpack.c.l.b16 %v655
    %v738 = vunpack.c.h.b16 %v655
    %v739 = vunpack.c.l.b16 %v656
    %v740 = vunpack.c.h.b16 %v656
    %v741 = vunpack.c.l.b16 %v657
    %v742 = vunpack.c.h.b16 %v657
    %v743 = vunpack.c.l.b16 %v658
    %v744 = vunpack.c.h.b16 %v658
    %v745 = vunpack.c.l.b16 %v659
    %v746 = vunpack.c.h.b16 %v659
    %v747 = vunpack.c.l.b16 %v660
    %v748 = vunpack.c.h.b16 %v660
    %v749 = vunpack.c.l.b16 %v661
    %v750 = vunpack.c.h.b16 %v661
    %v751 = vunpack.c.l.b16 %v662
    %v752 = vunpack.c.h.b16 %v662
    %v753 = vunpack.c.l.b16 %v663
    %v754 = vunpack.c.h.b16 %v663
    %v755 = vunpack.c.l.b16 %v664
    %v756 = vunpack.c.h.b16 %v664
    %v757 = vunpack.c.l.b16 %v665
    %v758 = vunpack.c.h.b16 %v665
    %v759 = vunpack.c.l.b16 %v666
    %v760 = vunpack.c.h.b16 %v666
    %v761 = vunpack.c.l.b16 %v667
    %v762 = vunpack.c.h.b16 %v667
    %v763 = vunpack.c.l.b16 %v668
    %v764 = vunpack.c.h.b16 %v668
    %v765 = vunpack.c.l.b16 %v669
    %v766 = vunpack.c.h.b16 %v669
    %v767 = vpack.c.b16 %v705, %v703
    %v768 = vpack.c.b16 %v706, %v704
    %v769 = vpack.c.b16 %v709, %v707
    %v770 = vpack.c.b16 %v710, %v708
    %v771 = vpack.c.b16 %v713, %v711
    %v772 = vpack.c.b16 %v714, %v712
    %v773 = vpack.c.b16 %v717, %v715
    %v774 = vpack.c.b16 %v718, %v716
    %v775 = vpack.c.b16 %v721, %v719
    %v776 = vpack.c.b16 %v722, %v720
    %v777 = vpack.c.b16 %v725, %v723
    %v778 = vpack.c.b16 %v726, %v724
    %v779 = vpack.c.b16 %v729, %v727
    %v780 = vpack.c.b16 %v730, %v728
    %v781 = vpack.c.b16 %v733, %v731
    %v782 = vpack.c.b16 %v734, %v732
    %v783 = vpack.c.b16 %v737, %v735
    %v784 = vpack.c.b16 %v738, %v736
    %v785 = vpack.c.b16 %v741, %v739
    %v786 = vpack.c.b16 %v742, %v740
    %v787 = vpack.c.b16 %v745, %v743
    %v788 = vpack.c.b16 %v746, %v744
    %v789 = vpack.c.b16 %v749, %v747
    %v790 = vpack.c.b16 %v750, %v748
    %v791 = vpack.c.b16 %v753, %v751
    %v792 = vpack.c.b16 %v754, %v752
    %v793 = vpack.c.b16 %v757, %v755
    %v794 = vpack.c.b16 %v758, %v756
    %v795 = vpack.c.b16 %v761, %v759
    %v796 = vpack.c.b16 %v762, %v760
    %v797 = vpack.c.b16 %v765, %v763
    %v798 = vpack.c.b16 %v766, %v764
    %831 = vmatprep.subr.bf16.mxu0 %v768
    %832 = vmatpush1.bf16.msra.mxu0 %v767
    %833 = vmatprep.subr.bf16.mxu0 %v770
    %834 = vmatpush1.bf16.msra.mxu0 %v769
    %835 = vmatprep.subr.bf16.mxu0 %v772
    %836 = vmatpush1.bf16.msra.mxu0 %v771
    %837 = vmatprep.subr.bf16.mxu0 %v774
    %838 = vmatpush1.bf16.msra.mxu0 %v773
    %839 = vmatprep.subr.bf16.mxu0 %v776
    %840 = vmatpush1.bf16.msra.mxu0 %v775
    %841 = vmatprep.subr.bf16.mxu0 %v778
    %842 = vmatpush1.bf16.msra.mxu0 %v777
    %843 = vmatprep.subr.bf16.mxu0 %v780
    %844 = vmatpush1.bf16.msra.mxu0 %v779
    %845 = vmatprep.subr.bf16.mxu0 %v782
    %846 = vmatpush1.bf16.msra.mxu0 %v781
    %847 = vmatprep.subr.bf16.mxu0 %v784
    %848 = vmatpush1.bf16.msra.mxu0 %v783
    %849 = vmatprep.subr.bf16.mxu0 %v786
    %850 = vmatpush1.bf16.msra.mxu0 %v785
    %851 = vmatprep.subr.bf16.mxu0 %v788
    %852 = vmatpush1.bf16.msra.mxu0 %v787
    %853 = vmatprep.subr.bf16.mxu0 %v790
    %854 = vmatpush1.bf16.msra.mxu0 %v789
    %855 = vmatprep.subr.bf16.mxu0 %v792
    %856 = vmatpush1.bf16.msra.mxu0 %v791
    %857 = vmatprep.subr.bf16.mxu0 %v794
    %858 = vmatpush1.bf16.msra.mxu0 %v793
    %859 = vmatprep.subr.bf16.mxu0 %v796
    %860 = vmatpush1.bf16.msra.mxu0 %v795
    %861 = vmatprep.subr.bf16.mxu0 %v798
    %862 = vmatpush1.bf16.msra.mxu0 %v797
    %863 = vmatprep.mubr.bf16.mxu0 %v637
    %864 = vmatmul.mubr.bf16.gmra.mrb[0].mxu0 %v636
    %v865 = vpop.f32.mrb[0].mxu0
    %v866 = vadd.f32 0.0, %v865
    %v867 = vpop.f32.mrb[0].mxu0
    %v868 = vadd.f32 0.0, %v867
    %v869 = vpop.f32.mrb[0].mxu0
    %v870 = vadd.f32 0.0, %v869
    %v871 = vpop.f32.mrb[0].mxu0
    %v872 = vadd.f32 0.0, %v871
    %873 = vdwg.mxu0
    %v874 = vpack.c.bf16 %v870, %v866
    %v875 = vpack.c.bf16 %v872, %v868
    %v878 = vunpack.c.l.s4 1966171168
    %v879 = vunpack.c.0.s8 %v878
    %v880 = vlaneseq
    %v881 = vshrl.u32 %v880, 7
    %v882 = vsub.s32 %v879, %v881
    %v883 = vrot.slane %v670, %v882
    %v884 = vcombine.high %v883, %v883
    %v886 = vunpack.c.l.s4 1966171168
    %v887 = vunpack.c.0.s8 %v886
    %v888 = vlaneseq
    %v889 = vshrl.u32 %v888, 7
    %v890 = vsub.s32 %v887, %v889
    %v891 = vrot.slane %v883, %v890
    %v893 = vunpack.c.l.s4 1966171168
    %v894 = vunpack.c.0.s8 %v893
    %v895 = vlaneseq
    %v896 = vshrl.u32 %v895, 7
    %v897 = vsub.s32 %v894, %v896
    %v898 = vrot.slane %v884, %v897
    %v900 = vpack.i.b16 %v891, %v891
    %v902 = vlaneseq
    %v903 = vshrl.u32 %v902, 7
    %v904 = vsub.s32 0, %v903
    %v905 = vrot.slane %v900, %v904
    %v907 = vpack.i.b16 %v898, %v898
    %v909 = vlaneseq
    %v910 = vshrl.u32 %v909, 7
    %v911 = vsub.s32 0, %v910
    %v912 = vrot.slane %v907, %v911
    %v913 = vadd.bf16 %v874, %v905
    %v914 = vadd.bf16 %v875, %v912
    %v917 = vunpack.c.l.b16 %v913
    %v918 = vunpack.c.l.b16 %v914
    %v919 = vunpack.c.h.b16 %v913
    %v920 = vunpack.c.h.b16 %v914
    %v921 = vpack.c.b16 %v918, %v917
    %v922 = vpack.c.b16 %v920, %v919
    %925 = vst [vmem:[%s7] sm:$0xff] %v921
    %926 = vst [vmem:[%s7 + $0x8] sm:$0xff] %v922
    // Predicated region
    $region42: #{fwd.1} parent=1 // pred_check
      _
    $region43: #{fwd.1} parent=1 // pred_check_branch
      %928 = sbr.rel (0) target = $region45
    $region44: #{fwd.1} parent=1 // pred_region
      _
    $region45: #{fwd.1} parent=1 // pred_fallthru
      _
    // Predicated region
    $region46: #{fwd.1} parent=1 // pred_check
      _
    $region47: #{fwd.1} parent=1 // pred_check_branch
      %930 = sbr.rel (0) target = $region49
    $region48: #{fwd.1} parent=1 // pred_region
      _
    $region49: #{fwd.1} parent=1 // pred_fallthru
      _
    %931 = vsyncpa [#allocation3], 1
    %932 = vsyncpa [#allocation5], 1

</llo_original>
